<compile_context>
chip_gen: v6e
topology: v6e:2x2x1
jax: 0.10.0
libtpu: 0.0.40
codegen_flags: <defaults>
</compile_context>

<pallas_src>
import jax
import jax.numpy as jnp
from jax.experimental import pallas as pl
from jax.experimental.pallas import tpu as pltpu


def _gnn_kernel(x_ref, abd_ref,
                w0_ref, b0_ref,
                wc1_ref, bc1_ref,
                w1a_ref, w1b_ref, b1_ref,
                wc2_ref, bc2_ref,
                w2a_ref, w2b_ref, b2_ref,
                out_ref):
    # Block-diagonal adjacency for this group of TB graphs: (M, M), M = TB*N.
    # Upcast once; reused by the degree sum and both conv matmuls.
    a_bd = abd_ref[...].astype(jnp.float32)                       # (M, M)
    deg = jnp.sum(a_bd, axis=-1, keepdims=True)                   # per-graph row sums (M,1)
    dinv = jax.lax.rsqrt(jnp.maximum(deg, 1.0))                   # clamp(min=1)^(-1/2)

    # ---- mlp0: Linear(din -> H) + ReLU on the flattened (M, din) slab ----------------
    x0 = jnp.dot(x_ref[...], w0_ref[...],
                 preferred_element_type=jnp.float32) + b0_ref[...]
    x0 = jnp.maximum(x0, 0.0)                                     # (M, H)

    def gcn(h, w_ref, b_ref):
        # D^-1/2 A D^-1/2 (h W) + b, as two MXU-sized (M, *) matmuls.
        hw = dinv * jnp.dot(h, w_ref[...], preferred_element_type=jnp.float32)
        ah = jnp.dot(a_bd, hw, preferred_element_type=jnp.float32)
        return dinv * ah + b_ref[...]

    # ---- conv1 ------------------------------------------------------------------------
    x1 = gcn(x0, wc1_ref, bc1_ref)

    # ---- mlp1: ReLU -> Linear(2H -> H) -> ReLU (x0 already >= 0; concat -> split W) ---
    x2 = (jnp.dot(x0, w1a_ref[...], preferred_element_type=jnp.float32)
          + jnp.dot(jnp.maximum(x1, 0.0), w1b_ref[...],
                    preferred_element_type=jnp.float32)
          + b1_ref[...])
    x2 = jnp.maximum(x2, 0.0)

    # ---- conv2 ------------------------------------------------------------------------
    x3 = gcn(x2, wc2_ref, bc2_ref)

    # ---- mlp2: ReLU -> Linear(2H -> dout) (x2 already >= 0; concat -> split W) --------
    # dout is tiny, so we accept the narrow masked store (few hundred bytes/step).
    x4 = (jnp.dot(x2, w2a_ref[...], preferred_element_type=jnp.float32)
          + jnp.dot(jnp.maximum(x3, 0.0), w2b_ref[...],
                    preferred_element_type=jnp.float32)
          + b2_ref[...])
    out_ref[...] = x4


def _pick_tb(B, N, *, max_rows=1024):
    """Graphs per grid step.

    Big enough that Linear/conv matmuls run on >=100-row slabs and the ~0.35 us/step
    overhead is amortized; capped so the block-diagonal adjacency ((TB*N)^2 bf16,
    double-buffered) stays a few MiB (v7x 64 MiB VMEM / 32 MiB scoped default); and
    split into >=2 balanced groups so v7x's two TensorCores both get real work.
    """
    max_tb = max(1, max_rows // N)
    if B <= 1:
        return 1
    return max(1, min(max_tb, pl.cdiv(B, 2)))


def dense_gnn_mlp(x, adj, params, *, tb=None, adj_dtype=jnp.bfloat16):
    """x: (B, N, din) f32, adj: (B, N, N) 0/1 mask. Returns (B, N, dout) f32.

    NOTE: the default adj_dtype=bfloat16 is exact only for 0/1 adjacencies; pass
    adj_dtype=jnp.float32 for weighted adjacencies.
    """
    B, N, din = x.shape
    H = params["wc1"].shape[0]
    dout = params["w2"].shape[1]

    TB = _pick_tb(B, N) if tb is None else max(1, min(tb, B))
    G = pl.cdiv(B, TB)
    M = TB * N
    if G > 1 and M % 8:
        raise ValueError("TB*N must be a multiple of 8 when the grid has >1 step")

    pad = G * TB - B
    if pad:
        # Zero-padded graphs are harmless: deg clamps to 1, their rows are bias-only
        # and get sliced off below.
        x = jnp.pad(x, ((0, pad), (0, 0), (0, 0)))
        adj = jnp.pad(adj, ((0, pad), (0, 0), (0, 0)))

    # Flatten node rows in HBM (free metadata reshape) so every Linear sees (M, F).
    xf = x.reshape(G * M, din)

    # Block-diagonal adjacency per group: one (M, M) @ (M, H) MXU pass per conv layer.
    adj_g = adj.astype(adj_dtype).reshape(G, TB, N, N)
    eye = jnp.eye(TB, dtype=adj_dtype)
    a_bd = adj_g[:, :, :, None, :] * eye[None, :, None, :, None]    # (G, TB, N, TB, N)
    a_bd = a_bd.reshape(G * M, M)

    # Split-weight form of the two concatenated Linear layers.
    w1a, w1b = params["w1"][:H], params["w1"][H:]
    w2a, w2b = params["w2"][:H], params["w2"][H:]

    def full(shape):
        return pl.BlockSpec(shape, lambda g: (0, 0))

    in_specs = [
        pl.BlockSpec((M, din), lambda g: (g, 0)),                 # x slab
        pl.BlockSpec((M, M), lambda g: (g, 0)),                   # block-diag adjacency
        full((din, H)), full((1, H)),                             # mlp0
        full((H, H)), full((1, H)),                               # conv1
        full((H, H)), full((H, H)), full((1, H)),                 # mlp1 (split)
        full((H, H)), full((1, H)),                               # conv2
        full((H, dout)), full((H, dout)), full((1, dout)),        # mlp2 (split)
    ]

    out = pl.pallas_call(
        _gnn_kernel,
        out_shape=jax.ShapeDtypeStruct((G * M, dout), jnp.float32),
        grid=(G,),
        in_specs=in_specs,
        out_specs=pl.BlockSpec((M, dout), lambda g: (g, 0)),
        compiler_params=pltpu.CompilerParams(
            dimension_semantics=("parallel",)),   # balanced graph groups -> both TCs on v7x
    )(xf, a_bd,
      params["w0"], params["b0"],
      params["wc1"], params["bc1"],
      w1a, w1b, params["b1"],
      params["wc2"], params["bc2"],
      w2a, w2b, params["b2"])

    return out.reshape(G * TB, N, dout)[:B]


def _reference(x, adj, p):
    # Pure-JAX reference mirroring the PyTorch forward.
    def gcn(h, w, b):
        deg = jnp.clip(jnp.sum(adj, axis=-1), min=1.0)
        dinv = deg ** -0.5
        adj_n = dinv[..., :, None] * adj * dinv[..., None, :]
        return jnp.einsum("bij,bjh->bih", adj_n, h @ w) + b

    x0 = jax.nn.relu(x @ p["w0"] + p["b0"])
    x1 = gcn(x0, p["wc1"], p["bc1"])
    x2 = jax.nn.relu(jax.nn.relu(jnp.concatenate([x0, x1], -1)) @ p["w1"] + p["b1"])
    x3 = gcn(x2, p["wc2"], p["bc2"])
    x4 = jax.nn.relu(jnp.concatenate([x2, x3], -1)) @ p["w2"] + p["b2"]
    return x4


def _init_params(key, din, H, dout):
    ks = jax.random.split(key, 10)
    def w(k, i, o, scale):
        return (jax.random.normal(k, (i, o), jnp.float32) * scale).astype(jnp.float32)
    return {
        "w0":  w(ks[0], din, H, 0.3),      "b0":  w(ks[1], 1, H, 0.1),
        "wc1": w(ks[2], H, H, 0.2),        "bc1": w(ks[3], 1, H, 0.1),
        "w1":  w(ks[4], 2 * H, H, 0.2),    "b1":  w(ks[5], 1, H, 0.1),
        "wc2": w(ks[6], H, H, 0.2),        "bc2": w(ks[7], 1, H, 0.1),
        "w2":  w(ks[8], 2 * H, dout, 0.2), "b2":  w(ks[9], 1, dout, 0.1),
    }


def _make_inputs(key, B, N, din):
    kx, ka = jax.random.split(key)
    x = jax.random.normal(kx, (B, N, din), jnp.float32)
    a = (jax.random.uniform(ka, (B, N, N)) > 0.5).astype(jnp.float32)
    adj = jnp.clip(a + jnp.swapaxes(a, -1, -2), 0.0, 1.0)
    adj = adj * (1.0 - jnp.eye(N, dtype=jnp.float32))   # symmetric 0/1, no self-loops
    return x, adj


if __name__ == "__main__":
    N, din, H, dout = 16, 8, 32, 1
    key = jax.random.PRNGKey(0)
    k1, k2, kp = jax.random.split(key, 3)
    params = _init_params(kp, din, H, dout)

    # Primary check: B=10 -> TB=5, G=2 balanced groups (both TCs on v7x), no padding.
    x, adj = _make_inputs(k1, 10, N, din)
    out = jax.block_until_ready(dense_gnn_mlp(x, adj, params))
    ref = _reference(x, adj, params)
    assert out.shape == (10, N, dout)
    assert jnp.allclose(out, ref, atol=1e-4, rtol=1e-4), "mismatch vs reference (B=10)"

    # Secondary check: B=3 -> TB=2, G=2 with one zero-padded graph (pad path).
    x2, adj2 = _make_inputs(k2, 3, N, din)
    out2 = jax.block_until_ready(dense_gnn_mlp(x2, adj2, params))
    ref2 = _reference(x2, adj2, params)
    assert out2.shape == (3, N, dout)
    assert jnp.allclose(out2, ref2, atol=1e-4, rtol=1e-4), "mismatch vs reference (B=3)"

    print("KERNEL_OK")
</pallas_src>

<mosaic_0001>
module attributes {stable_mosaic.version = 11 : i64} {
  func.func @_gnn_kernel(%arg0: i32, %arg1: memref<80x8xf32, #tpu.memory_space<vmem>>, %arg2: memref<80x80xbf16, #tpu.memory_space<vmem>>, %arg3: memref<8x32xf32, #tpu.memory_space<vmem>>, %arg4: memref<1x32xf32, #tpu.memory_space<vmem>>, %arg5: memref<32x32xf32, #tpu.memory_space<vmem>>, %arg6: memref<1x32xf32, #tpu.memory_space<vmem>>, %arg7: memref<32x32xf32, #tpu.memory_space<vmem>>, %arg8: memref<32x32xf32, #tpu.memory_space<vmem>>, %arg9: memref<1x32xf32, #tpu.memory_space<vmem>>, %arg10: memref<32x32xf32, #tpu.memory_space<vmem>>, %arg11: memref<1x32xf32, #tpu.memory_space<vmem>>, %arg12: memref<32x1xf32, #tpu.memory_space<vmem>>, %arg13: memref<32x1xf32, #tpu.memory_space<vmem>>, %arg14: memref<1x1xf32, #tpu.memory_space<vmem>>, %arg15: memref<80x1xf32, #tpu.memory_space<vmem>>) attributes {dimension_semantics = [#tpu.dimension_semantics<parallel>], iteration_bounds = array<i64: 2>, scalar_prefetch = 0 : i64, scratch_operands = 0 : i64, tpu.core_type = #tpu.core_type<tc>, window_params = [{transform_indices = @transform_0, window_bounds = array<i64: 80, 8>}, {transform_indices = @transform_1, window_bounds = array<i64: 80, 80>}, {pipeline_mode = #tpu.pipeline_mode<synchronous>, transform_indices = @transform_2, window_bounds = array<i64: 8, 32>}, {pipeline_mode = #tpu.pipeline_mode<synchronous>, transform_indices = @transform_3, window_bounds = array<i64: 1, 32>}, {pipeline_mode = #tpu.pipeline_mode<synchronous>, transform_indices = @transform_4, window_bounds = array<i64: 32, 32>}, {pipeline_mode = #tpu.pipeline_mode<synchronous>, transform_indices = @transform_5, window_bounds = array<i64: 1, 32>}, {pipeline_mode = #tpu.pipeline_mode<synchronous>, transform_indices = @transform_6, window_bounds = array<i64: 32, 32>}, {pipeline_mode = #tpu.pipeline_mode<synchronous>, transform_indices = @transform_7, window_bounds = array<i64: 32, 32>}, {pipeline_mode = #tpu.pipeline_mode<synchronous>, transform_indices = @transform_8, window_bounds = array<i64: 1, 32>}, {pipeline_mode = #tpu.pipeline_mode<synchronous>, transform_indices = @transform_9, window_bounds = array<i64: 32, 32>}, {pipeline_mode = #tpu.pipeline_mode<synchronous>, transform_indices = @transform_10, window_bounds = array<i64: 1, 32>}, {pipeline_mode = #tpu.pipeline_mode<synchronous>, transform_indices = @transform_11, window_bounds = array<i64: 32, 1>}, {pipeline_mode = #tpu.pipeline_mode<synchronous>, transform_indices = @transform_12, window_bounds = array<i64: 32, 1>}, {pipeline_mode = #tpu.pipeline_mode<synchronous>, transform_indices = @transform_13, window_bounds = array<i64: 1, 1>}, {transform_indices = @transform_14, window_bounds = array<i64: 80, 1>}]} {
    %c0 = arith.constant 0 : index
    %c0_0 = arith.constant 0 : index
    %0 = vector.load %arg2[%c0, %c0_0] : memref<80x80xbf16, #tpu.memory_space<vmem>>, vector<80x80xbf16>
    %1 = arith.extf %0 : vector<80x80xbf16> to vector<80x80xf32>
    %cst = arith.constant dense<0.000000e+00> : vector<80xf32>
    %2 = vector.multi_reduction <add>, %1, %cst [1] : vector<80x80xf32> to vector<80xf32>
    %3 = vector.shape_cast %2 : vector<80xf32> to vector<80x1xf32>
    %cst_1 = arith.constant 1.000000e+00 : f32
    %4 = vector.broadcast %cst_1 : f32 to vector<80x1xf32>
    %5 = arith.maximumf %3, %4 : vector<80x1xf32>
    %6 = math.rsqrt %5 : vector<80x1xf32>
    %c0_2 = arith.constant 0 : index
    %c0_3 = arith.constant 0 : index
    %7 = vector.load %arg1[%c0_2, %c0_3] : memref<80x8xf32, #tpu.memory_space<vmem>>, vector<80x8xf32>
    %c0_4 = arith.constant 0 : index
    %c0_5 = arith.constant 0 : index
    %8 = vector.load %arg3[%c0_4, %c0_5] : memref<8x32xf32, #tpu.memory_space<vmem>>, vector<8x32xf32>
    %cst_6 = arith.constant dense<0.000000e+00> : vector<80x32xf32>
    %9 = tpu.matmul %7, %8, %cst_6 {dimension_numbers = #tpu.dot_dimension_numbers<[1], [0], [0], [1], [0, 0, 1, 1], [], []>} : vector<80x8xf32>, vector<8x32xf32>, vector<80x32xf32> -> vector<80x32xf32>
    %c0_7 = arith.constant 0 : index
    %c0_8 = arith.constant 0 : index
    %10 = vector.load %arg4[%c0_7, %c0_8] : memref<1x32xf32, #tpu.memory_space<vmem>>, vector<1x32xf32>
    %11 = vector.broadcast %10 : vector<1x32xf32> to vector<80x32xf32>
    %12 = arith.addf %9, %11 : vector<80x32xf32>
    %cst_9 = arith.constant 0.000000e+00 : f32
    %13 = vector.broadcast %cst_9 : f32 to vector<80x32xf32>
    %14 = arith.maximumf %12, %13 : vector<80x32xf32>
    %c0_10 = arith.constant 0 : index
    %c0_11 = arith.constant 0 : index
    %15 = vector.load %arg5[%c0_10, %c0_11] : memref<32x32xf32, #tpu.memory_space<vmem>>, vector<32x32xf32>
    %cst_12 = arith.constant dense<0.000000e+00> : vector<80x32xf32>
    %16 = tpu.matmul %14, %15, %cst_12 {dimension_numbers = #tpu.dot_dimension_numbers<[1], [0], [0], [1], [0, 0, 1, 1], [], []>} : vector<80x32xf32>, vector<32x32xf32>, vector<80x32xf32> -> vector<80x32xf32>
    %17 = vector.broadcast %6 : vector<80x1xf32> to vector<80x32xf32>
    %18 = arith.mulf %17, %16 : vector<80x32xf32>
    %cst_13 = arith.constant dense<0.000000e+00> : vector<80x32xf32>
    %19 = tpu.matmul %1, %18, %cst_13 {dimension_numbers = #tpu.dot_dimension_numbers<[1], [0], [0], [1], [0, 0, 1, 1], [], []>} : vector<80x80xf32>, vector<80x32xf32>, vector<80x32xf32> -> vector<80x32xf32>
    %20 = vector.broadcast %6 : vector<80x1xf32> to vector<80x32xf32>
    %21 = arith.mulf %20, %19 : vector<80x32xf32>
    %c0_14 = arith.constant 0 : index
    %c0_15 = arith.constant 0 : index
    %22 = vector.load %arg6[%c0_14, %c0_15] : memref<1x32xf32, #tpu.memory_space<vmem>>, vector<1x32xf32>
    %23 = vector.broadcast %22 : vector<1x32xf32> to vector<80x32xf32>
    %24 = arith.addf %21, %23 : vector<80x32xf32>
    %c0_16 = arith.constant 0 : index
    %c0_17 = arith.constant 0 : index
    %25 = vector.load %arg7[%c0_16, %c0_17] : memref<32x32xf32, #tpu.memory_space<vmem>>, vector<32x32xf32>
    %cst_18 = arith.constant dense<0.000000e+00> : vector<80x32xf32>
    %26 = tpu.matmul %14, %25, %cst_18 {dimension_numbers = #tpu.dot_dimension_numbers<[1], [0], [0], [1], [0, 0, 1, 1], [], []>} : vector<80x32xf32>, vector<32x32xf32>, vector<80x32xf32> -> vector<80x32xf32>
    %cst_19 = arith.constant 0.000000e+00 : f32
    %27 = vector.broadcast %cst_19 : f32 to vector<80x32xf32>
    %28 = arith.maximumf %24, %27 : vector<80x32xf32>
    %c0_20 = arith.constant 0 : index
    %c0_21 = arith.constant 0 : index
    %29 = vector.load %arg8[%c0_20, %c0_21] : memref<32x32xf32, #tpu.memory_space<vmem>>, vector<32x32xf32>
    %cst_22 = arith.constant dense<0.000000e+00> : vector<80x32xf32>
    %30 = tpu.matmul %28, %29, %cst_22 {dimension_numbers = #tpu.dot_dimension_numbers<[1], [0], [0], [1], [0, 0, 1, 1], [], []>} : vector<80x32xf32>, vector<32x32xf32>, vector<80x32xf32> -> vector<80x32xf32>
    %31 = arith.addf %26, %30 : vector<80x32xf32>
    %c0_23 = arith.constant 0 : index
    %c0_24 = arith.constant 0 : index
    %32 = vector.load %arg9[%c0_23, %c0_24] : memref<1x32xf32, #tpu.memory_space<vmem>>, vector<1x32xf32>
    %33 = vector.broadcast %32 : vector<1x32xf32> to vector<80x32xf32>
    %34 = arith.addf %31, %33 : vector<80x32xf32>
    %cst_25 = arith.constant 0.000000e+00 : f32
    %35 = vector.broadcast %cst_25 : f32 to vector<80x32xf32>
    %36 = arith.maximumf %34, %35 : vector<80x32xf32>
    %c0_26 = arith.constant 0 : index
    %c0_27 = arith.constant 0 : index
    %37 = vector.load %arg10[%c0_26, %c0_27] : memref<32x32xf32, #tpu.memory_space<vmem>>, vector<32x32xf32>
    %cst_28 = arith.constant dense<0.000000e+00> : vector<80x32xf32>
    %38 = tpu.matmul %36, %37, %cst_28 {dimension_numbers = #tpu.dot_dimension_numbers<[1], [0], [0], [1], [0, 0, 1, 1], [], []>} : vector<80x32xf32>, vector<32x32xf32>, vector<80x32xf32> -> vector<80x32xf32>
    %39 = vector.broadcast %6 : vector<80x1xf32> to vector<80x32xf32>
    %40 = arith.mulf %39, %38 : vector<80x32xf32>
    %cst_29 = arith.constant dense<0.000000e+00> : vector<80x32xf32>
    %41 = tpu.matmul %1, %40, %cst_29 {dimension_numbers = #tpu.dot_dimension_numbers<[1], [0], [0], [1], [0, 0, 1, 1], [], []>} : vector<80x80xf32>, vector<80x32xf32>, vector<80x32xf32> -> vector<80x32xf32>
    %42 = vector.broadcast %6 : vector<80x1xf32> to vector<80x32xf32>
    %43 = arith.mulf %42, %41 : vector<80x32xf32>
    %c0_30 = arith.constant 0 : index
    %c0_31 = arith.constant 0 : index
    %44 = vector.load %arg11[%c0_30, %c0_31] : memref<1x32xf32, #tpu.memory_space<vmem>>, vector<1x32xf32>
    %45 = vector.broadcast %44 : vector<1x32xf32> to vector<80x32xf32>
    %46 = arith.addf %43, %45 : vector<80x32xf32>
    %c0_32 = arith.constant 0 : index
    %c0_33 = arith.constant 0 : index
    %47 = vector.load %arg12[%c0_32, %c0_33] : memref<32x1xf32, #tpu.memory_space<vmem>>, vector<32x1xf32>
    %cst_34 = arith.constant dense<0.000000e+00> : vector<80x1xf32>
    %48 = tpu.matmul %36, %47, %cst_34 {dimension_numbers = #tpu.dot_dimension_numbers<[1], [0], [0], [1], [0, 0, 1, 1], [], []>} : vector<80x32xf32>, vector<32x1xf32>, vector<80x1xf32> -> vector<80x1xf32>
    %cst_35 = arith.constant 0.000000e+00 : f32
    %49 = vector.broadcast %cst_35 : f32 to vector<80x32xf32>
    %50 = arith.maximumf %46, %49 : vector<80x32xf32>
    %c0_36 = arith.constant 0 : index
    %c0_37 = arith.constant 0 : index
    %51 = vector.load %arg13[%c0_36, %c0_37] : memref<32x1xf32, #tpu.memory_space<vmem>>, vector<32x1xf32>
    %cst_38 = arith.constant dense<0.000000e+00> : vector<80x1xf32>
    %52 = tpu.matmul %50, %51, %cst_38 {dimension_numbers = #tpu.dot_dimension_numbers<[1], [0], [0], [1], [0, 0, 1, 1], [], []>} : vector<80x32xf32>, vector<32x1xf32>, vector<80x1xf32> -> vector<80x1xf32>
    %53 = arith.addf %48, %52 : vector<80x1xf32>
    %c0_39 = arith.constant 0 : index
    %c0_40 = arith.constant 0 : index
    %54 = vector.load %arg14[%c0_39, %c0_40] : memref<1x1xf32, #tpu.memory_space<vmem>>, vector<1x1xf32>
    %55 = vector.broadcast %54 : vector<1x1xf32> to vector<80x1xf32>
    %56 = arith.addf %53, %55 : vector<80x1xf32>
    %c0_41 = arith.constant 0 : index
    %c0_42 = arith.constant 0 : index
    %57 = vector.load %arg15[%c0_41, %c0_42] : memref<80x1xf32, #tpu.memory_space<vmem>>, vector<80x1xf32>
    tpu.vector_store %arg15[%c0_41, %c0_42], %56 {strides = array<i32>} : memref<80x1xf32, #tpu.memory_space<vmem>>, vector<80x1xf32>,
    return
  }
  func.func @transform_0(%arg0: i32) -> (i32, i32) {
    %c0_i32 = arith.constant 0 : i32
    %c0_i32_0 = arith.constant 0 : i32
    return %arg0, %c0_i32 : i32, i32
  }
  func.func @transform_1(%arg0: i32) -> (i32, i32) {
    %c0_i32 = arith.constant 0 : i32
    %c0_i32_0 = arith.constant 0 : i32
    return %arg0, %c0_i32 : i32, i32
  }
  func.func @transform_2(%arg0: i32) -> (i32, i32) {
    %c0_i32 = arith.constant 0 : i32
    %c0_i32_0 = arith.constant 0 : i32
    %c0_i32_1 = arith.constant 0 : i32
    return %c0_i32, %c0_i32_0 : i32, i32
  }
  func.func @transform_3(%arg0: i32) -> (i32, i32) {
    %c0_i32 = arith.constant 0 : i32
    %c0_i32_0 = arith.constant 0 : i32
    %c0_i32_1 = arith.constant 0 : i32
    return %c0_i32, %c0_i32_0 : i32, i32
  }
  func.func @transform_4(%arg0: i32) -> (i32, i32) {
    %c0_i32 = arith.constant 0 : i32
    %c0_i32_0 = arith.constant 0 : i32
    %c0_i32_1 = arith.constant 0 : i32
    return %c0_i32, %c0_i32_0 : i32, i32
  }
  func.func @transform_5(%arg0: i32) -> (i32, i32) {
    %c0_i32 = arith.constant 0 : i32
    %c0_i32_0 = arith.constant 0 : i32
    %c0_i32_1 = arith.constant 0 : i32
    return %c0_i32, %c0_i32_0 : i32, i32
  }
  func.func @transform_6(%arg0: i32) -> (i32, i32) {
    %c0_i32 = arith.constant 0 : i32
    %c0_i32_0 = arith.constant 0 : i32
    %c0_i32_1 = arith.constant 0 : i32
    return %c0_i32, %c0_i32_0 : i32, i32
  }
  func.func @transform_7(%arg0: i32) -> (i32, i32) {
    %c0_i32 = arith.constant 0 : i32
    %c0_i32_0 = arith.constant 0 : i32
    %c0_i32_1 = arith.constant 0 : i32
    return %c0_i32, %c0_i32_0 : i32, i32
  }
  func.func @transform_8(%arg0: i32) -> (i32, i32) {
    %c0_i32 = arith.constant 0 : i32
    %c0_i32_0 = arith.constant 0 : i32
    %c0_i32_1 = arith.constant 0 : i32
    return %c0_i32, %c0_i32_0 : i32, i32
  }
  func.func @transform_9(%arg0: i32) -> (i32, i32) {
    %c0_i32 = arith.constant 0 : i32
    %c0_i32_0 = arith.constant 0 : i32
    %c0_i32_1 = arith.constant 0 : i32
    return %c0_i32, %c0_i32_0 : i32, i32
  }
  func.func @transform_10(%arg0: i32) -> (i32, i32) {
    %c0_i32 = arith.constant 0 : i32
    %c0_i32_0 = arith.constant 0 : i32
    %c0_i32_1 = arith.constant 0 : i32
    return %c0_i32, %c0_i32_0 : i32, i32
  }
  func.func @transform_11(%arg0: i32) -> (i32, i32) {
    %c0_i32 = arith.constant 0 : i32
    %c0_i32_0 = arith.constant 0 : i32
    %c0_i32_1 = arith.constant 0 : i32
    return %c0_i32, %c0_i32_0 : i32, i32
  }
  func.func @transform_12(%arg0: i32) -> (i32, i32) {
    %c0_i32 = arith.constant 0 : i32
    %c0_i32_0 = arith.constant 0 : i32
    %c0_i32_1 = arith.constant 0 : i32
    return %c0_i32, %c0_i32_0 : i32, i32
  }
  func.func @transform_13(%arg0: i32) -> (i32, i32) {
    %c0_i32 = arith.constant 0 : i32
    %c0_i32_0 = arith.constant 0 : i32
    %c0_i32_1 = arith.constant 0 : i32
    return %c0_i32, %c0_i32_0 : i32, i32
  }
  func.func @transform_14(%arg0: i32) -> (i32, i32) {
    %c0_i32 = arith.constant 0 : i32
    %c0_i32_0 = arith.constant 0 : i32
    return %arg0, %c0_i32 : i32, i32
  }
}

</mosaic_0001>

<llo_original>
// kernel: tpu_custom_call.1
$region0: #{tpu_custom_call.1}
  #allocation0 [shape = 'u32[]', space=smem, size = 0x4, offset = 0x4, fixed_abs, tag = 'smem constant byte address 0x4 - core index']
  #allocation1 [shape = 'u32[144,128]{1,0:T(1,128)}', space=vmem, size = 0x12000, scoped, tag = 'internal scratch']
  #allocation2 [shape = 'f32[1,1]{1,0:T(1,128)S(1)}', space=vmem, size = 0x200, scoped, tag = 'scoped memory for tpu_custom_call.1']
  %s0 = inlined_call_operand.vmem [shape: f32[160,8], index: 0, kind: input, shape index: {}]
  %s1 = inlined_call_operand.vmem [shape: bf16[160,80], index: 1, kind: input, shape index: {}]
  %s2 = inlined_call_operand.vmem [shape: f32[8,32], index: 2, kind: input, shape index: {}]
  %s3 = inlined_call_operand.vmem [shape: f32[1,32], index: 3, kind: input, shape index: {}]
  %s4 = inlined_call_operand.vmem [shape: f32[32,32], index: 4, kind: input, shape index: {}]
  %s5 = inlined_call_operand.vmem [shape: f32[1,32], index: 5, kind: input, shape index: {}]
  %s6 = inlined_call_operand.vmem [shape: f32[32,32], index: 6, kind: input, shape index: {}]
  %s7 = inlined_call_operand.vmem [shape: f32[32,32], index: 7, kind: input, shape index: {}]
  %s8 = inlined_call_operand.vmem [shape: f32[1,32], index: 8, kind: input, shape index: {}]
  %s9 = inlined_call_operand.vmem [shape: f32[32,32], index: 9, kind: input, shape index: {}]
  %s10 = inlined_call_operand.vmem [shape: f32[1,32], index: 10, kind: input, shape index: {}]
  %s11 = inlined_call_operand.vmem [shape: f32[32,1], index: 11, kind: input, shape index: {}]
  %s12 = inlined_call_operand.vmem [shape: f32[32,1], index: 12, kind: input, shape index: {}]
  %s13 = inlined_call_operand.<no memory space> [shape: f32[1,1], index: 13, kind: input, shape index: {}]
  %s14 = inlined_call_operand.vmem [shape: f32[160,1], index: 14, kind: output, shape index: {}]
  %s15 = sld [smem:[#allocation0]]
  $region89: #{tpu_custom_call.1} parent=0
    _
  %s17 = ssub.s32 1, %s15
  %s18 = scalar_select 0, %s17, %s15
  %v19 = vstv %s13
  %20 = vst [vmem:[#allocation2] sm:$0x1] %v19
  loop: start=0, step=1, limit=4
  $region2: #{tpu_custom_call.1} parent=0 // loop_pre_header
    _
  $region3: #{tpu_custom_call.1} parent=0 // loop_header
    %s22 = sphi 0, %s26
    %p23 = scmp.ge.s32.totalorder %s22, 4
    %s32 = sphi 0, %s34
    %s35 = sphi 0, %s32
    %s36 = sphi 0, %s35
    %s52 = sphi 0, %s36
    %s58 = sphi 0, %s60
    %s61 = sphi 0, %s58
    %s62 = sphi 0, %s61
    %s78 = sphi 0, %s62
    %s82 = sphi 0, %s82
    %s84 = sphi 0, %s82
    %s85 = sphi 0, %s84
    %s99 = sphi 0, %s85
    %s103 = sphi 0, %s103
    %s105 = sphi 0, %s103
    %s106 = sphi 0, %s105
    %s120 = sphi 0, %s106
    %s124 = sphi 0, %s124
    %s126 = sphi 0, %s124
    %s127 = sphi 0, %s126
    %s141 = sphi 0, %s127
    %s145 = sphi 0, %s145
    %s147 = sphi 0, %s145
    %s148 = sphi 0, %s147
    %s162 = sphi 0, %s148
    %s166 = sphi 0, %s166
    %s168 = sphi 0, %s166
    %s169 = sphi 0, %s168
    %s183 = sphi 0, %s169
    %s187 = sphi 0, %s187
    %s189 = sphi 0, %s187
    %s190 = sphi 0, %s189
    %s204 = sphi 0, %s190
    %s208 = sphi 0, %s208
    %s210 = sphi 0, %s208
    %s211 = sphi 0, %s210
    %s225 = sphi 0, %s211
    %s229 = sphi 0, %s229
    %s231 = sphi 0, %s229
    %s232 = sphi 0, %s231
    %s246 = sphi 0, %s232
    %s250 = sphi 0, %s250
    %s252 = sphi 0, %s250
    %s253 = sphi 0, %s252
    %s267 = sphi 0, %s253
    %s271 = sphi 0, %s271
    %s273 = sphi 0, %s271
    %s274 = sphi 0, %s273
    %s288 = sphi 0, %s274
    %s292 = sphi 0, %s292
    %s294 = sphi 0, %s292
    %s295 = sphi 0, %s294
    %s309 = sphi 0, %s295
    %s313 = sphi 0, %s313
    %s315 = sphi 0, %s313
    %s316 = sphi 0, %s315
    %s330 = sphi 0, %s316
    %s336 = sphi 0, %s338
    %s339 = sphi 0, %s336
    %s340 = sphi 0, %s339
    %s356 = sphi 0, %s340
  $region4: #{tpu_custom_call.1} parent=0 // loop_header_branch
    %25 = sbr.rel (%p23) target = $region8
  $region5: #{tpu_custom_call.1} parent=0 // loop_body
    %s27 = ssub.s32 %s22, 1
    %s28 = ssub.s32 %s22, 2
    %s29 = sadd.s32 %s22, 1
    %s30 = ssub.s32 %s22, %s29
    %p31 = scmp.eq.s32.totalorder %s30, 0
    %s33 = sadd.s32 %s32, 1
    %s34 = scalar_select %p31, %s32, %s33
    %p37 = pneg %p31
    %p38 = scmp.eq.s32.totalorder %s22, 1
    %p39 = por %p37, %p38
    %p40 = scmp.ne.s32.totalorder %s32, %s35
    %p41 = scmp.eq.s32.totalorder %s22, 0
    %p42 = por %p40, %p41
    %p43 = scmp.ne.s32.totalorder %s32, %s35
    %p44 = scmp.eq.s32.totalorder %s27, 1
    %p45 = por %p43, %p44
    %p46 = scmp.ne.s32.totalorder %s35, %s36
    %p47 = scmp.eq.s32.totalorder %s27, 0
    %p48 = por %p46, %p47
    %p49 = scmp.ne.s32.totalorder %s35, %s36
    %p50 = scmp.eq.s32.totalorder %s28, 1
    %p51 = por %p49, %p50
    %p53 = scmp.ne.s32.totalorder %s36, %s52
    %p54 = scmp.eq.s32.totalorder %s28, 0
    %p55 = por %p53, %p54
    %s56 = ssub.s32 %s22, %s29
    %p57 = scmp.eq.s32.totalorder %s56, 0
    %s59 = sadd.s32 %s58, 1
    %s60 = scalar_select %p57, %s58, %s59
    %p63 = pneg %p57
    %p64 = scmp.eq.s32.totalorder %s22, 1
    %p65 = por %p63, %p64
    %p66 = scmp.ne.s32.totalorder %s58, %s61
    %p67 = scmp.eq.s32.totalorder %s22, 0
    %p68 = por %p66, %p67
    %p69 = scmp.ne.s32.totalorder %s58, %s61
    %p70 = scmp.eq.s32.totalorder %s27, 1
    %p71 = por %p69, %p70
    %p72 = scmp.ne.s32.totalorder %s61, %s62
    %p73 = scmp.eq.s32.totalorder %s27, 0
    %p74 = por %p72, %p73
    %p75 = scmp.ne.s32.totalorder %s61, %s62
    %p76 = scmp.eq.s32.totalorder %s28, 1
    %p77 = por %p75, %p76
    %p79 = scmp.ne.s32.totalorder %s62, %s78
    %p80 = scmp.eq.s32.totalorder %s28, 0
    %p81 = por %p79, %p80
    %s83 = sadd.s32 %s82, 1
    %p86 = scmp.eq.s32.totalorder %s22, 1
    %p87 = scmp.ne.s32.totalorder %s82, %s84
    %p88 = scmp.eq.s32.totalorder %s22, 0
    %p89 = por %p87, %p88
    %p90 = scmp.ne.s32.totalorder %s82, %s84
    %p91 = scmp.eq.s32.totalorder %s27, 1
    %p92 = por %p90, %p91
    %p93 = scmp.ne.s32.totalorder %s84, %s85
    %p94 = scmp.eq.s32.totalorder %s27, 0
    %p95 = por %p93, %p94
    %p96 = scmp.ne.s32.totalorder %s84, %s85
    %p97 = scmp.eq.s32.totalorder %s28, 1
    %p98 = por %p96, %p97
    %p100 = scmp.ne.s32.totalorder %s85, %s99
    %p101 = scmp.eq.s32.totalorder %s28, 0
    %p102 = por %p100, %p101
    %s104 = sadd.s32 %s103, 1
    %p107 = scmp.eq.s32.totalorder %s22, 1
    %p108 = scmp.ne.s32.totalorder %s103, %s105
    %p109 = scmp.eq.s32.totalorder %s22, 0
    %p110 = por %p108, %p109
    %p111 = scmp.ne.s32.totalorder %s103, %s105
    %p112 = scmp.eq.s32.totalorder %s27, 1
    %p113 = por %p111, %p112
    %p114 = scmp.ne.s32.totalorder %s105, %s106
    %p115 = scmp.eq.s32.totalorder %s27, 0
    %p116 = por %p114, %p115
    %p117 = scmp.ne.s32.totalorder %s105, %s106
    %p118 = scmp.eq.s32.totalorder %s28, 1
    %p119 = por %p117, %p118
    %p121 = scmp.ne.s32.totalorder %s106, %s120
    %p122 = scmp.eq.s32.totalorder %s28, 0
    %p123 = por %p121, %p122
    %s125 = sadd.s32 %s124, 1
    %p128 = scmp.eq.s32.totalorder %s22, 1
    %p129 = scmp.ne.s32.totalorder %s124, %s126
    %p130 = scmp.eq.s32.totalorder %s22, 0
    %p131 = por %p129, %p130
    %p132 = scmp.ne.s32.totalorder %s124, %s126
    %p133 = scmp.eq.s32.totalorder %s27, 1
    %p134 = por %p132, %p133
    %p135 = scmp.ne.s32.totalorder %s126, %s127
    %p136 = scmp.eq.s32.totalorder %s27, 0
    %p137 = por %p135, %p136
    %p138 = scmp.ne.s32.totalorder %s126, %s127
    %p139 = scmp.eq.s32.totalorder %s28, 1
    %p140 = por %p138, %p139
    %p142 = scmp.ne.s32.totalorder %s127, %s141
    %p143 = scmp.eq.s32.totalorder %s28, 0
    %p144 = por %p142, %p143
    %s146 = sadd.s32 %s145, 1
    %p149 = scmp.eq.s32.totalorder %s22, 1
    %p150 = scmp.ne.s32.totalorder %s145, %s147
    %p151 = scmp.eq.s32.totalorder %s22, 0
    %p152 = por %p150, %p151
    %p153 = scmp.ne.s32.totalorder %s145, %s147
    %p154 = scmp.eq.s32.totalorder %s27, 1
    %p155 = por %p153, %p154
    %p156 = scmp.ne.s32.totalorder %s147, %s148
    %p157 = scmp.eq.s32.totalorder %s27, 0
    %p158 = por %p156, %p157
    %p159 = scmp.ne.s32.totalorder %s147, %s148
    %p160 = scmp.eq.s32.totalorder %s28, 1
    %p161 = por %p159, %p160
    %p163 = scmp.ne.s32.totalorder %s148, %s162
    %p164 = scmp.eq.s32.totalorder %s28, 0
    %p165 = por %p163, %p164
    %s167 = sadd.s32 %s166, 1
    %p170 = scmp.eq.s32.totalorder %s22, 1
    %p171 = scmp.ne.s32.totalorder %s166, %s168
    %p172 = scmp.eq.s32.totalorder %s22, 0
    %p173 = por %p171, %p172
    %p174 = scmp.ne.s32.totalorder %s166, %s168
    %p175 = scmp.eq.s32.totalorder %s27, 1
    %p176 = por %p174, %p175
    %p177 = scmp.ne.s32.totalorder %s168, %s169
    %p178 = scmp.eq.s32.totalorder %s27, 0
    %p179 = por %p177, %p178
    %p180 = scmp.ne.s32.totalorder %s168, %s169
    %p181 = scmp.eq.s32.totalorder %s28, 1
    %p182 = por %p180, %p181
    %p184 = scmp.ne.s32.totalorder %s169, %s183
    %p185 = scmp.eq.s32.totalorder %s28, 0
    %p186 = por %p184, %p185
    %s188 = sadd.s32 %s187, 1
    %p191 = scmp.eq.s32.totalorder %s22, 1
    %p192 = scmp.ne.s32.totalorder %s187, %s189
    %p193 = scmp.eq.s32.totalorder %s22, 0
    %p194 = por %p192, %p193
    %p195 = scmp.ne.s32.totalorder %s187, %s189
    %p196 = scmp.eq.s32.totalorder %s27, 1
    %p197 = por %p195, %p196
    %p198 = scmp.ne.s32.totalorder %s189, %s190
    %p199 = scmp.eq.s32.totalorder %s27, 0
    %p200 = por %p198, %p199
    %p201 = scmp.ne.s32.totalorder %s189, %s190
    %p202 = scmp.eq.s32.totalorder %s28, 1
    %p203 = por %p201, %p202
    %p205 = scmp.ne.s32.totalorder %s190, %s204
    %p206 = scmp.eq.s32.totalorder %s28, 0
    %p207 = por %p205, %p206
    %s209 = sadd.s32 %s208, 1
    %p212 = scmp.eq.s32.totalorder %s22, 1
    %p213 = scmp.ne.s32.totalorder %s208, %s210
    %p214 = scmp.eq.s32.totalorder %s22, 0
    %p215 = por %p213, %p214
    %p216 = scmp.ne.s32.totalorder %s208, %s210
    %p217 = scmp.eq.s32.totalorder %s27, 1
    %p218 = por %p216, %p217
    %p219 = scmp.ne.s32.totalorder %s210, %s211
    %p220 = scmp.eq.s32.totalorder %s27, 0
    %p221 = por %p219, %p220
    %p222 = scmp.ne.s32.totalorder %s210, %s211
    %p223 = scmp.eq.s32.totalorder %s28, 1
    %p224 = por %p222, %p223
    %p226 = scmp.ne.s32.totalorder %s211, %s225
    %p227 = scmp.eq.s32.totalorder %s28, 0
    %p228 = por %p226, %p227
    %s230 = sadd.s32 %s229, 1
    %p233 = scmp.eq.s32.totalorder %s22, 1
    %p234 = scmp.ne.s32.totalorder %s229, %s231
    %p235 = scmp.eq.s32.totalorder %s22, 0
    %p236 = por %p234, %p235
    %p237 = scmp.ne.s32.totalorder %s229, %s231
    %p238 = scmp.eq.s32.totalorder %s27, 1
    %p239 = por %p237, %p238
    %p240 = scmp.ne.s32.totalorder %s231, %s232
    %p241 = scmp.eq.s32.totalorder %s27, 0
    %p242 = por %p240, %p241
    %p243 = scmp.ne.s32.totalorder %s231, %s232
    %p244 = scmp.eq.s32.totalorder %s28, 1
    %p245 = por %p243, %p244
    %p247 = scmp.ne.s32.totalorder %s232, %s246
    %p248 = scmp.eq.s32.totalorder %s28, 0
    %p249 = por %p247, %p248
    %s251 = sadd.s32 %s250, 1
    %p254 = scmp.eq.s32.totalorder %s22, 1
    %p255 = scmp.ne.s32.totalorder %s250, %s252
    %p256 = scmp.eq.s32.totalorder %s22, 0
    %p257 = por %p255, %p256
    %p258 = scmp.ne.s32.totalorder %s250, %s252
    %p259 = scmp.eq.s32.totalorder %s27, 1
    %p260 = por %p258, %p259
    %p261 = scmp.ne.s32.totalorder %s252, %s253
    %p262 = scmp.eq.s32.totalorder %s27, 0
    %p263 = por %p261, %p262
    %p264 = scmp.ne.s32.totalorder %s252, %s253
    %p265 = scmp.eq.s32.totalorder %s28, 1
    %p266 = por %p264, %p265
    %p268 = scmp.ne.s32.totalorder %s253, %s267
    %p269 = scmp.eq.s32.totalorder %s28, 0
    %p270 = por %p268, %p269
    %s272 = sadd.s32 %s271, 1
    %p275 = scmp.eq.s32.totalorder %s22, 1
    %p276 = scmp.ne.s32.totalorder %s271, %s273
    %p277 = scmp.eq.s32.totalorder %s22, 0
    %p278 = por %p276, %p277
    %p279 = scmp.ne.s32.totalorder %s271, %s273
    %p280 = scmp.eq.s32.totalorder %s27, 1
    %p281 = por %p279, %p280
    %p282 = scmp.ne.s32.totalorder %s273, %s274
    %p283 = scmp.eq.s32.totalorder %s27, 0
    %p284 = por %p282, %p283
    %p285 = scmp.ne.s32.totalorder %s273, %s274
    %p286 = scmp.eq.s32.totalorder %s28, 1
    %p287 = por %p285, %p286
    %p289 = scmp.ne.s32.totalorder %s274, %s288
    %p290 = scmp.eq.s32.totalorder %s28, 0
    %p291 = por %p289, %p290
    %s293 = sadd.s32 %s292, 1
    %p296 = scmp.eq.s32.totalorder %s22, 1
    %p297 = scmp.ne.s32.totalorder %s292, %s294
    %p298 = scmp.eq.s32.totalorder %s22, 0
    %p299 = por %p297, %p298
    %p300 = scmp.ne.s32.totalorder %s292, %s294
    %p301 = scmp.eq.s32.totalorder %s27, 1
    %p302 = por %p300, %p301
    %p303 = scmp.ne.s32.totalorder %s294, %s295
    %p304 = scmp.eq.s32.totalorder %s27, 0
    %p305 = por %p303, %p304
    %p306 = scmp.ne.s32.totalorder %s294, %s295
    %p307 = scmp.eq.s32.totalorder %s28, 1
    %p308 = por %p306, %p307
    %p310 = scmp.ne.s32.totalorder %s295, %s309
    %p311 = scmp.eq.s32.totalorder %s28, 0
    %p312 = por %p310, %p311
    %s314 = sadd.s32 %s313, 1
    %p317 = scmp.eq.s32.totalorder %s22, 1
    %p318 = scmp.ne.s32.totalorder %s313, %s315
    %p319 = scmp.eq.s32.totalorder %s22, 0
    %p320 = por %p318, %p319
    %p321 = scmp.ne.s32.totalorder %s313, %s315
    %p322 = scmp.eq.s32.totalorder %s27, 1
    %p323 = por %p321, %p322
    %p324 = scmp.ne.s32.totalorder %s315, %s316
    %p325 = scmp.eq.s32.totalorder %s27, 0
    %p326 = por %p324, %p325
    %p327 = scmp.ne.s32.totalorder %s315, %s316
    %p328 = scmp.eq.s32.totalorder %s28, 1
    %p329 = por %p327, %p328
    %p331 = scmp.ne.s32.totalorder %s316, %s330
    %p332 = scmp.eq.s32.totalorder %s28, 0
    %p333 = por %p331, %p332
    %s334 = ssub.s32 %s22, %s29
    %p335 = scmp.eq.s32.totalorder %s334, 0
    %s337 = sadd.s32 %s336, 1
    %s338 = scalar_select %p335, %s336, %s337
    %p341 = pneg %p335
    %p342 = scmp.eq.s32.totalorder %s22, 1
    %p343 = por %p341, %p342
    %p344 = scmp.ne.s32.totalorder %s336, %s339
    %p345 = scmp.eq.s32.totalorder %s22, 0
    %p346 = por %p344, %p345
    %p347 = scmp.ne.s32.totalorder %s336, %s339
    %p348 = scmp.eq.s32.totalorder %s27, 1
    %p349 = por %p347, %p348
    %p350 = scmp.ne.s32.totalorder %s339, %s340
    %p351 = scmp.eq.s32.totalorder %s27, 0
    %p352 = por %p350, %p351
    %p353 = scmp.ne.s32.totalorder %s339, %s340
    %p354 = scmp.eq.s32.totalorder %s28, 1
    %p355 = por %p353, %p354
    %p357 = scmp.ne.s32.totalorder %s340, %s356
    %p358 = scmp.eq.s32.totalorder %s28, 0
    %p359 = por %p357, %p358
    %p360 = scmp.le.s32.totalorder 1, %s22
    %p361 = scmp.lt.s32.totalorder %s22, 3
    %p362 = pnand %p360, %p361
    %p363 = pneg %p362
    // Predicated region
    $region9: #{tpu_custom_call.1} parent=5 // pred_check
      _
    $region10: #{tpu_custom_call.1} parent=5 // pred_check_branch
      %365 = sbr.rel (%p362) target = $region12
    $region11: #{tpu_custom_call.1} parent=5 // pred_region
      %s366 = ssub.s32 %s22, 1
      // Predicated region
      $region13: #{tpu_custom_call.1} parent=11 // pred_check
        %p367 = pneg %p95
      $region14: #{tpu_custom_call.1} parent=11 // pred_check_branch
        %369 = sbr.rel (%p367) target = $region16
      $region15: #{tpu_custom_call.1} parent=11 // pred_region
        _
      $region16: #{tpu_custom_call.1} parent=11 // pred_fallthru
        _
      // Predicated region
      $region17: #{tpu_custom_call.1} parent=11 // pred_check
        %p370 = pneg %p116
      $region18: #{tpu_custom_call.1} parent=11 // pred_check_branch
        %372 = sbr.rel (%p370) target = $region20
      $region19: #{tpu_custom_call.1} parent=11 // pred_region
        _
      $region20: #{tpu_custom_call.1} parent=11 // pred_fallthru
        _
      // Predicated region
      $region21: #{tpu_custom_call.1} parent=11 // pred_check
        %p373 = pneg %p137
      $region22: #{tpu_custom_call.1} parent=11 // pred_check_branch
        %375 = sbr.rel (%p373) target = $region24
      $region23: #{tpu_custom_call.1} parent=11 // pred_region
        _
      $region24: #{tpu_custom_call.1} parent=11 // pred_fallthru
        _
      // Predicated region
      $region25: #{tpu_custom_call.1} parent=11 // pred_check
        %p376 = pneg %p158
      $region26: #{tpu_custom_call.1} parent=11 // pred_check_branch
        %378 = sbr.rel (%p376) target = $region28
      $region27: #{tpu_custom_call.1} parent=11 // pred_region
        _
      $region28: #{tpu_custom_call.1} parent=11 // pred_fallthru
        _
      // Predicated region
      $region29: #{tpu_custom_call.1} parent=11 // pred_check
        %p379 = pneg %p179
      $region30: #{tpu_custom_call.1} parent=11 // pred_check_branch
        %381 = sbr.rel (%p379) target = $region32
      $region31: #{tpu_custom_call.1} parent=11 // pred_region
        _
      $region32: #{tpu_custom_call.1} parent=11 // pred_fallthru
        _
      // Predicated region
      $region33: #{tpu_custom_call.1} parent=11 // pred_check
        %p382 = pneg %p200
      $region34: #{tpu_custom_call.1} parent=11 // pred_check_branch
        %384 = sbr.rel (%p382) target = $region36
      $region35: #{tpu_custom_call.1} parent=11 // pred_region
        _
      $region36: #{tpu_custom_call.1} parent=11 // pred_fallthru
        _
      // Predicated region
      $region37: #{tpu_custom_call.1} parent=11 // pred_check
        %p385 = pneg %p221
      $region38: #{tpu_custom_call.1} parent=11 // pred_check_branch
        %387 = sbr.rel (%p385) target = $region40
      $region39: #{tpu_custom_call.1} parent=11 // pred_region
        _
      $region40: #{tpu_custom_call.1} parent=11 // pred_fallthru
        _
      // Predicated region
      $region41: #{tpu_custom_call.1} parent=11 // pred_check
        %p388 = pneg %p242
      $region42: #{tpu_custom_call.1} parent=11 // pred_check_branch
        %390 = sbr.rel (%p388) target = $region44
      $region43: #{tpu_custom_call.1} parent=11 // pred_region
        _
      $region44: #{tpu_custom_call.1} parent=11 // pred_fallthru
        _
      // Predicated region
      $region45: #{tpu_custom_call.1} parent=11 // pred_check
        %p391 = pneg %p263
      $region46: #{tpu_custom_call.1} parent=11 // pred_check_branch
        %393 = sbr.rel (%p391) target = $region48
      $region47: #{tpu_custom_call.1} parent=11 // pred_region
        _
      $region48: #{tpu_custom_call.1} parent=11 // pred_fallthru
        _
      // Predicated region
      $region49: #{tpu_custom_call.1} parent=11 // pred_check
        %p394 = pneg %p284
      $region50: #{tpu_custom_call.1} parent=11 // pred_check_branch
        %396 = sbr.rel (%p394) target = $region52
      $region51: #{tpu_custom_call.1} parent=11 // pred_region
        _
      $region52: #{tpu_custom_call.1} parent=11 // pred_fallthru
        _
      // Predicated region
      $region53: #{tpu_custom_call.1} parent=11 // pred_check
        %p397 = pneg %p305
      $region54: #{tpu_custom_call.1} parent=11 // pred_check_branch
        %399 = sbr.rel (%p397) target = $region56
      $region55: #{tpu_custom_call.1} parent=11 // pred_region
        _
      $region56: #{tpu_custom_call.1} parent=11 // pred_fallthru
        _
      // Predicated region
      $region57: #{tpu_custom_call.1} parent=11 // pred_check
        %p400 = pneg %p326
      $region58: #{tpu_custom_call.1} parent=11 // pred_check_branch
        %402 = sbr.rel (%p400) target = $region60
      $region59: #{tpu_custom_call.1} parent=11 // pred_region
        _
      $region60: #{tpu_custom_call.1} parent=11 // pred_fallthru
        _
    $region12: #{tpu_custom_call.1} parent=5 // pred_fallthru
      _
    %p403 = scmp.lt.s32.totalorder %s22, 2
    // Predicated region
    $region61: #{tpu_custom_call.1} parent=5 // pred_check
      %p404 = pneg %p403
    $region62: #{tpu_custom_call.1} parent=5 // pred_check_branch
      %406 = sbr.rel (%p404) target = $region64
    $region63: #{tpu_custom_call.1} parent=5 // pred_region
      // Predicated region
      $region65: #{tpu_custom_call.1} parent=63 // pred_check
        %p407 = pneg %p42
      $region66: #{tpu_custom_call.1} parent=63 // pred_check_branch
        %409 = sbr.rel (%p407) target = $region68
      $region67: #{tpu_custom_call.1} parent=63 // pred_region
        %s410 = smul.u32 10, %s22
        %p411 = scmp.lt.s32.totalorder %s410, 19
        %s412 = scalar_select %p411, %s410, 19
        %s413 = smul.addr %s412, 8
        %s414 = scalar_lea.vmem %s0, %s413
        %s415 = smul.u32 10, %s22
      $region68: #{tpu_custom_call.1} parent=63 // pred_fallthru
        _
      // Predicated region
      $region69: #{tpu_custom_call.1} parent=63 // pred_check
        %p416 = pneg %p68
      $region70: #{tpu_custom_call.1} parent=63 // pred_check_branch
        %418 = sbr.rel (%p416) target = $region72
      $region71: #{tpu_custom_call.1} parent=63 // pred_region
        %s419 = smul.u32 10, %s22
        %p420 = scmp.lt.s32.totalorder %s419, 19
        %s421 = scalar_select %p420, %s419, 19
        %s422 = smul.addr %s421, 4
        %s423 = scalar_lea.vmem %s1, %s422
        %s424 = smul.u32 10, %s22
      $region72: #{tpu_custom_call.1} parent=63 // pred_fallthru
        _
    $region64: #{tpu_custom_call.1} parent=5 // pred_fallthru
      _
    %p425 = scmp.le.s32.totalorder 1, %s22
    %p426 = scmp.lt.s32.totalorder %s22, 3
    %p427 = pnand %p425, %p426
    %p428 = pneg %p427
    // Predicated region
    $region73: #{tpu_custom_call.1} parent=5 // pred_check
      _
    $region74: #{tpu_custom_call.1} parent=5 // pred_check_branch
      %430 = sbr.rel (%p427) target = $region76
    $region75: #{tpu_custom_call.1} parent=5 // pred_region
      %s431 = ssub.s32 %s22, 1
      %s432 = smul.u32 10, %s27
      %p433 = scmp.lt.s32.totalorder %s432, 19
      %s434 = scalar_select %p433, %s432, 19
      %s435 = smul.addr %s434, 8
      %s436 = scalar_lea.vmem %s0, %s435
      %p437 = pneg %p48
      %p438 = pneg %p45
      %s439 = smul.u32 10, %s27
      %p440 = scmp.lt.s32.totalorder %s439, 19
      %s441 = scalar_select %p440, %s439, 19
      %s442 = smul.addr %s441, 4
      %s443 = scalar_lea.vmem %s1, %s442
      %p444 = pneg %p74
      %p445 = pneg %p71
      %p446 = pneg %p95
      %p447 = pneg %p92
      %p448 = pneg %p116
      %p449 = pneg %p113
      %p450 = pneg %p137
      %p451 = pneg %p134
      %p452 = pneg %p158
      %p453 = pneg %p155
      %p454 = pneg %p179
      %p455 = pneg %p176
      %p456 = pneg %p200
      %p457 = pneg %p197
      %p458 = pneg %p221
      %p459 = pneg %p218
      %p460 = pneg %p242
      %p461 = pneg %p239
      %p462 = pneg %p263
      %p463 = pneg %p260
      %p464 = pneg %p284
      %p465 = pneg %p281
      %p466 = pneg %p305
      %p467 = pneg %p302
      %p468 = pneg %p326
      %p469 = pneg %p323
      %p470 = pneg %p352
      %p471 = pneg %p349
      %s472 = smul.u32 10, %s27
      %p473 = scmp.lt.s32.totalorder %s472, 19
      %s474 = scalar_select %p473, %s472, 19
      %s475 = smul.addr %s474, 8
      %s476 = scalar_lea.vmem %s14, %s475
      %s477 = smul.u32 10, %s27
      %p478 = scmp.lt.s32.totalorder %s477, 19
      %s479 = scalar_select %p478, %s477, 19
      %s480 = smul.addr %s479, 8
      %s481 = scalar_lea.vmem %s0, %s480
      %s482 = smul.u32 10, %s27
      %s483 = smul.u32 10, %s27
      %p484 = scmp.lt.s32.totalorder %s483, 19
      %s485 = scalar_select %p484, %s483, 19
      %s486 = smul.addr %s485, 4
      %s487 = scalar_lea.vmem %s1, %s486
      %s488 = smul.u32 10, %s27
      %s489 = smul.u32 10, %s27
      %p490 = scmp.lt.s32.totalorder %s489, 19
      %s491 = scalar_select %p490, %s489, 19
      %s492 = smul.addr %s491, 8
      %s493 = scalar_lea.vmem %s14, %s492
      %s494 = smul.u32 10, %s27
      %v495 = vld [vmem:[%s487] sm:$0xf]
      %v496 = vld [vmem:[%s487 + $0x4] sm:$0xf]
      %v497 = vld [vmem:[%s487 + $0x8] sm:$0xf]
      %v498 = vld [vmem:[%s487 + $0xc] sm:$0xf]
      %v499 = vld [vmem:[%s487 + $0x10] sm:$0xf]
      %v500 = vld [vmem:[%s487 + $0x14] sm:$0xf]
      %v501 = vld [vmem:[%s487 + $0x18] sm:$0xf]
      %v502 = vld [vmem:[%s487 + $0x1c] sm:$0xf]
      %v503 = vld [vmem:[%s487 + $0x20] sm:$0xf]
      %v504 = vld [vmem:[%s487 + $0x24] sm:$0xf]
      %v505 = vunpack.c.l.bf16 %v495
      %v506 = vunpack.c.l.bf16 %v496
      %v507 = vunpack.c.l.bf16 %v497
      %v508 = vunpack.c.l.bf16 %v498
      %v509 = vunpack.c.l.bf16 %v499
      %v510 = vunpack.c.l.bf16 %v500
      %v511 = vunpack.c.l.bf16 %v501
      %v512 = vunpack.c.l.bf16 %v502
      %v513 = vunpack.c.l.bf16 %v503
      %v514 = vunpack.c.l.bf16 %v504
      %vm515 = vcmask 654336
      %v516 = vsel %vm515, %v505, 0.0
      %517 = vadd.xlane.f32.xlu0 %v516
      %v518 = vpop.xlane.xlu0 %517
      %v519 = vsel %vm515, %v506, 0.0
      %520 = vadd.xlane.f32.xlu0 %v519
      %v521 = vpop.xlane.xlu0 %520
      %v522 = vsel %vm515, %v507, 0.0
      %523 = vadd.xlane.f32.xlu0 %v522
      %v524 = vpop.xlane.xlu0 %523
      %v525 = vsel %vm515, %v508, 0.0
      %526 = vadd.xlane.f32.xlu0 %v525
      %v527 = vpop.xlane.xlu0 %526
      %v528 = vsel %vm515, %v509, 0.0
      %529 = vadd.xlane.f32.xlu0 %v528
      %v530 = vpop.xlane.xlu0 %529
      %v531 = vsel %vm515, %v510, 0.0
      %532 = vadd.xlane.f32.xlu0 %v531
      %v533 = vpop.xlane.xlu0 %532
      %v534 = vsel %vm515, %v511, 0.0
      %535 = vadd.xlane.f32.xlu0 %v534
      %v536 = vpop.xlane.xlu0 %535
      %v537 = vsel %vm515, %v512, 0.0
      %538 = vadd.xlane.f32.xlu0 %v537
      %v539 = vpop.xlane.xlu0 %538
      %v540 = vsel %vm515, %v513, 0.0
      %541 = vadd.xlane.f32.xlu0 %v540
      %v542 = vpop.xlane.xlu0 %541
      %v543 = vsel %vm515, %v514, 0.0
      %544 = vadd.xlane.f32.xlu0 %v543
      %v545 = vpop.xlane.xlu0 %544
      %v546 = vmax.f32 %v518, 1.0
      %v547 = vmax.f32 %v521, 1.0
      %v548 = vmax.f32 %v524, 1.0
      %v549 = vmax.f32 %v527, 1.0
      %v550 = vmax.f32 %v530, 1.0
      %v551 = vmax.f32 %v533, 1.0
      %v552 = vmax.f32 %v536, 1.0
      %v553 = vmax.f32 %v539, 1.0
      %v554 = vmax.f32 %v542, 1.0
      %v555 = vmax.f32 %v545, 1.0
      %v556 = vrsqrt.pop %v546
      %v557 = vrsqrt.pop %v547
      %v558 = vrsqrt.pop %v548
      %v559 = vrsqrt.pop %v549
      %v560 = vrsqrt.pop %v550
      %v561 = vrsqrt.pop %v551
      %v562 = vrsqrt.pop %v552
      %v563 = vrsqrt.pop %v553
      %v564 = vrsqrt.pop %v554
      %v565 = vrsqrt.pop %v555
      %v566 = vld [vmem:[%s481] sm:$0xff]
      %v567 = vld [vmem:[%s481 + $0x8] sm:$0xff]
      %v568 = vld [vmem:[%s481 + $0x10] sm:$0xff]
      %v569 = vld [vmem:[%s481 + $0x18] sm:$0xff]
      %v570 = vld [vmem:[%s481 + $0x20] sm:$0xff]
      %v571 = vld [vmem:[%s481 + $0x28] sm:$0xff]
      %v572 = vld [vmem:[%s481 + $0x30] sm:$0xff]
      %v573 = vld [vmem:[%s481 + $0x38] sm:$0xff]
      %v574 = vld [vmem:[%s481 + $0x40] sm:$0xff]
      %v575 = vld [vmem:[%s481 + $0x48] sm:$0xff]
      %v576 = vld [vmem:[%s2] sm:$0xff]
      %v577 = vld [vmem:[%s3] sm:$0x1]
      %v579 = vlaneseq
      %v580 = vshrl.u32 %v579, 7
      %v581 = vsub.s32 0, %v580
      %v582 = vrot.slane %v577, %v581
      %vm584 = vcmask 64512
      %v586 = vsel %vm584, %v566, 0
      %v589 = vsel %vm584, %v567, 0
      %v592 = vsel %vm584, %v568, 0
      %v595 = vsel %vm584, %v569, 0
      %v598 = vsel %vm584, %v570, 0
      %v601 = vsel %vm584, %v571, 0
      %v604 = vsel %vm584, %v572, 0
      %v607 = vsel %vm584, %v573, 0
      %v610 = vsel %vm584, %v574, 0
      %v613 = vsel %vm584, %v575, 0
      %615 = vmatprep.subr.mxu0 0.0
      %616 = vmatpush1.msra.mxu0 0.0
      %617 = vmatprep.subr.mxu0 0.0
      %618 = vmatpush1.msra.mxu0 0.0
      %619 = vmatprep.subr.mxu0 0.0
      %620 = vmatpush1.msra.mxu0 0.0
      %621 = vmatprep.subr.mxu0 0.0
      %622 = vmatpush1.msra.mxu0 0.0
      %623 = vmatprep.subr.mxu0 0.0
      %624 = vmatpush1.msra.mxu0 0.0
      %625 = vmatprep.subr.mxu0 0.0
      %626 = vmatpush1.msra.mxu0 0.0
      %627 = vmatprep.subr.mxu0 0.0
      %628 = vmatpush1.msra.mxu0 0.0
      %629 = vmatprep.subr.mxu0 0.0
      %630 = vmatpush1.msra.mxu0 0.0
      %631 = vmatprep.subr.mxu0 0.0
      %632 = vmatpush1.msra.mxu0 0.0
      %633 = vmatprep.subr.mxu0 0.0
      %634 = vmatpush1.msra.mxu0 0.0
      %635 = vmatprep.subr.mxu0 0.0
      %636 = vmatpush1.msra.mxu0 0.0
      %637 = vmatprep.subr.mxu0 0.0
      %638 = vmatpush1.msra.mxu0 0.0
      %639 = vmatprep.subr.mxu0 0.0
      %640 = vmatpush1.msra.mxu0 0.0
      %641 = vmatprep.subr.mxu0 0.0
      %642 = vmatpush1.msra.mxu0 0.0
      %643 = vmatprep.subr.mxu0 0.0
      %644 = vmatpush1.msra.mxu0 0.0
      %645 = vmatprep.subr.mxu0 0.0
      %646 = vmatpush1.msra.mxu0 %v576
      %647 = vmatprep.subr.mxu0 0.0
      %648 = vmatpush2.msra.mxu0 0.0
      %649 = vmatprep.subr.mxu0 0.0
      %650 = vmatpush2.msra.mxu0 0.0
      %651 = vmatprep.subr.mxu0 0.0
      %652 = vmatpush2.msra.mxu0 0.0
      %653 = vmatprep.subr.mxu0 0.0
      %654 = vmatpush2.msra.mxu0 0.0
      %655 = vmatprep.subr.mxu0 0.0
      %656 = vmatpush2.msra.mxu0 0.0
      %657 = vmatprep.subr.mxu0 0.0
      %658 = vmatpush2.msra.mxu0 0.0
      %659 = vmatprep.subr.mxu0 0.0
      %660 = vmatpush2.msra.mxu0 0.0
      %661 = vmatprep.subr.mxu0 0.0
      %662 = vmatpush2.msra.mxu0 0.0
      %663 = vmatprep.subr.mxu0 0.0
      %664 = vmatpush2.msra.mxu0 0.0
      %665 = vmatprep.subr.mxu0 0.0
      %666 = vmatpush2.msra.mxu0 0.0
      %667 = vmatprep.subr.mxu0 0.0
      %668 = vmatpush2.msra.mxu0 0.0
      %669 = vmatprep.subr.mxu0 0.0
      %670 = vmatpush2.msra.mxu0 0.0
      %671 = vmatprep.subr.mxu0 0.0
      %672 = vmatpush2.msra.mxu0 0.0
      %673 = vmatprep.subr.mxu0 0.0
      %674 = vmatpush2.msra.mxu0 0.0
      %675 = vmatprep.subr.mxu0 0.0
      %676 = vmatpush2.msra.mxu0 0.0
      %677 = vmatprep.subr.mxu0 0.0
      %678 = vmatpush2.msra.mxu0 0.0
      %679 = vmatprep.mubr.f32.mxu0 0.0
      %680 = vmatmul.mubr.f32.gmra.mxu0 %v586
      %v681 = vpop.f32.mrf.mxu0
      %v682 = vadd.f32 %v582, %v681
      %v683 = vpop.f32.mrf.mxu0
      %684 = vmatprep.mubr.f32.mxu0 0.0
      %685 = vmatmul.mubr.f32.gmra.mxu0 %v589
      %v686 = vpop.f32.mrf.mxu0
      %v687 = vadd.f32 %v582, %v686
      %v688 = vpop.f32.mrf.mxu0
      %689 = vmatprep.mubr.f32.mxu0 0.0
      %690 = vmatmul.mubr.f32.gmra.mxu0 %v592
      %v691 = vpop.f32.mrf.mxu0
      %v692 = vadd.f32 %v582, %v691
      %v693 = vpop.f32.mrf.mxu0
      %694 = vmatprep.mubr.f32.mxu0 0.0
      %695 = vmatmul.mubr.f32.gmra.mxu0 %v595
      %v696 = vpop.f32.mrf.mxu0
      %v697 = vadd.f32 %v582, %v696
      %v698 = vpop.f32.mrf.mxu0
      %699 = vmatprep.mubr.f32.mxu0 0.0
      %700 = vmatmul.mubr.f32.gmra.mxu0 %v598
      %v701 = vpop.f32.mrf.mxu0
      %v702 = vadd.f32 %v582, %v701
      %v703 = vpop.f32.mrf.mxu0
      %704 = vmatprep.mubr.f32.mxu0 0.0
      %705 = vmatmul.mubr.f32.gmra.mxu0 %v601
      %v706 = vpop.f32.mrf.mxu0
      %v707 = vadd.f32 %v582, %v706
      %v708 = vpop.f32.mrf.mxu0
      %709 = vmatprep.mubr.f32.mxu0 0.0
      %710 = vmatmul.mubr.f32.gmra.mxu0 %v604
      %v711 = vpop.f32.mrf.mxu0
      %v712 = vadd.f32 %v582, %v711
      %v713 = vpop.f32.mrf.mxu0
      %714 = vmatprep.mubr.f32.mxu0 0.0
      %715 = vmatmul.mubr.f32.gmra.mxu0 %v607
      %v716 = vpop.f32.mrf.mxu0
      %v717 = vadd.f32 %v582, %v716
      %v718 = vpop.f32.mrf.mxu0
      %719 = vmatprep.mubr.f32.mxu0 0.0
      %720 = vmatmul.mubr.f32.gmra.mxu0 %v610
      %v721 = vpop.f32.mrf.mxu0
      %v722 = vadd.f32 %v582, %v721
      %v723 = vpop.f32.mrf.mxu0
      %724 = vmatprep.mubr.f32.mxu0 0.0
      %725 = vmatmul.mubr.f32.gmra.mxu0 %v613
      %v726 = vpop.f32.mrf.mxu0
      %v727 = vadd.f32 %v582, %v726
      %v728 = vpop.f32.mrf.mxu0
      %729 = vdwg.mxu0
      %v730 = vmax.f32 %v682, 0.0
      %v731 = vmax.f32 %v687, 0.0
      %v732 = vmax.f32 %v692, 0.0
      %v733 = vmax.f32 %v697, 0.0
      %v734 = vmax.f32 %v702, 0.0
      %v735 = vmax.f32 %v707, 0.0
      %v736 = vmax.f32 %v712, 0.0
      %v737 = vmax.f32 %v717, 0.0
      %v738 = vmax.f32 %v722, 0.0
      %v739 = vmax.f32 %v727, 0.0
      %v740 = vld [vmem:[%s4] sm:$0xff]
      %v741 = vld [vmem:[%s4 + $0x8] sm:$0xff]
      %v742 = vld [vmem:[%s4 + $0x10] sm:$0xff]
      %v743 = vld [vmem:[%s4 + $0x18] sm:$0xff]
      %vm744 = vcmask 261120
      %v746 = vsel %vm744, %v730, 0
      %v749 = vsel %vm744, %v731, 0
      %v752 = vsel %vm744, %v732, 0
      %v755 = vsel %vm744, %v733, 0
      %v758 = vsel %vm744, %v734, 0
      %v761 = vsel %vm744, %v735, 0
      %v764 = vsel %vm744, %v736, 0
      %v767 = vsel %vm744, %v737, 0
      %v770 = vsel %vm744, %v738, 0
      %v773 = vsel %vm744, %v739, 0
      %775 = vmatprep.subr.mxu0 0.0
      %776 = vmatpush1.msra.mxu0 0.0
      %777 = vmatprep.subr.mxu0 0.0
      %778 = vmatpush1.msra.mxu0 0.0
      %779 = vmatprep.subr.mxu0 0.0
      %780 = vmatpush1.msra.mxu0 0.0
      %781 = vmatprep.subr.mxu0 0.0
      %782 = vmatpush1.msra.mxu0 0.0
      %783 = vmatprep.subr.mxu0 0.0
      %784 = vmatpush1.msra.mxu0 0.0
      %785 = vmatprep.subr.mxu0 0.0
      %786 = vmatpush1.msra.mxu0 0.0
      %787 = vmatprep.subr.mxu0 0.0
      %788 = vmatpush1.msra.mxu0 0.0
      %789 = vmatprep.subr.mxu0 0.0
      %790 = vmatpush1.msra.mxu0 0.0
      %791 = vmatprep.subr.mxu0 0.0
      %792 = vmatpush1.msra.mxu0 0.0
      %793 = vmatprep.subr.mxu0 0.0
      %794 = vmatpush1.msra.mxu0 0.0
      %795 = vmatprep.subr.mxu0 0.0
      %796 = vmatpush1.msra.mxu0 0.0
      %797 = vmatprep.subr.mxu0 0.0
      %798 = vmatpush1.msra.mxu0 0.0
      %799 = vmatprep.subr.mxu0 0.0
      %800 = vmatpush1.msra.mxu0 %v743
      %801 = vmatprep.subr.mxu0 0.0
      %802 = vmatpush1.msra.mxu0 %v742
      %803 = vmatprep.subr.mxu0 0.0
      %804 = vmatpush1.msra.mxu0 %v741
      %805 = vmatprep.subr.mxu0 0.0
      %806 = vmatpush1.msra.mxu0 %v740
      %807 = vmatprep.subr.mxu0 0.0
      %808 = vmatpush2.msra.mxu0 0.0
      %809 = vmatprep.subr.mxu0 0.0
      %810 = vmatpush2.msra.mxu0 0.0
      %811 = vmatprep.subr.mxu0 0.0
      %812 = vmatpush2.msra.mxu0 0.0
      %813 = vmatprep.subr.mxu0 0.0
      %814 = vmatpush2.msra.mxu0 0.0
      %815 = vmatprep.subr.mxu0 0.0
      %816 = vmatpush2.msra.mxu0 0.0
      %817 = vmatprep.subr.mxu0 0.0
      %818 = vmatpush2.msra.mxu0 0.0
      %819 = vmatprep.subr.mxu0 0.0
      %820 = vmatpush2.msra.mxu0 0.0
      %821 = vmatprep.subr.mxu0 0.0
      %822 = vmatpush2.msra.mxu0 0.0
      %823 = vmatprep.subr.mxu0 0.0
      %824 = vmatpush2.msra.mxu0 0.0
      %825 = vmatprep.subr.mxu0 0.0
      %826 = vmatpush2.msra.mxu0 0.0
      %827 = vmatprep.subr.mxu0 0.0
      %828 = vmatpush2.msra.mxu0 0.0
      %829 = vmatprep.subr.mxu0 0.0
      %830 = vmatpush2.msra.mxu0 0.0
      %831 = vmatprep.subr.mxu0 0.0
      %832 = vmatpush2.msra.mxu0 0.0
      %833 = vmatprep.subr.mxu0 0.0
      %834 = vmatpush2.msra.mxu0 0.0
      %835 = vmatprep.subr.mxu0 0.0
      %836 = vmatpush2.msra.mxu0 0.0
      %837 = vmatprep.subr.mxu0 0.0
      %838 = vmatpush2.msra.mxu0 0.0
      %839 = vmatprep.mubr.f32.mxu0 0.0
      %840 = vmatmul.mubr.f32.gmra.mxu0 %v746
      %v841 = vpop.f32.mrf.mxu0
      %v842 = vadd.f32 0.0, %v841
      %v843 = vpop.f32.mrf.mxu0
      %844 = vmatprep.mubr.f32.mxu0 0.0
      %845 = vmatmul.mubr.f32.gmra.mxu0 %v749
      %v846 = vpop.f32.mrf.mxu0
      %v847 = vadd.f32 0.0, %v846
      %v848 = vpop.f32.mrf.mxu0
      %849 = vmatprep.mubr.f32.mxu0 0.0
      %850 = vmatmul.mubr.f32.gmra.mxu0 %v752
      %v851 = vpop.f32.mrf.mxu0
      %v852 = vadd.f32 0.0, %v851
      %v853 = vpop.f32.mrf.mxu0
      %854 = vmatprep.mubr.f32.mxu0 0.0
      %855 = vmatmul.mubr.f32.gmra.mxu0 %v755
      %v856 = vpop.f32.mrf.mxu0
      %v857 = vadd.f32 0.0, %v856
      %v858 = vpop.f32.mrf.mxu0
      %859 = vmatprep.mubr.f32.mxu0 0.0
      %860 = vmatmul.mubr.f32.gmra.mxu0 %v758
      %v861 = vpop.f32.mrf.mxu0
      %v862 = vadd.f32 0.0, %v861
      %v863 = vpop.f32.mrf.mxu0
      %864 = vmatprep.mubr.f32.mxu0 0.0
      %865 = vmatmul.mubr.f32.gmra.mxu0 %v761
      %v866 = vpop.f32.mrf.mxu0
      %v867 = vadd.f32 0.0, %v866
      %v868 = vpop.f32.mrf.mxu0
      %869 = vmatprep.mubr.f32.mxu0 0.0
      %870 = vmatmul.mubr.f32.gmra.mxu0 %v764
      %v871 = vpop.f32.mrf.mxu0
      %v872 = vadd.f32 0.0, %v871
      %v873 = vpop.f32.mrf.mxu0
      %874 = vmatprep.mubr.f32.mxu0 0.0
      %875 = vmatmul.mubr.f32.gmra.mxu0 %v767
      %v876 = vpop.f32.mrf.mxu0
      %v877 = vadd.f32 0.0, %v876
      %v878 = vpop.f32.mrf.mxu0
      %879 = vmatprep.mubr.f32.mxu0 0.0
      %880 = vmatmul.mubr.f32.gmra.mxu0 %v770
      %v881 = vpop.f32.mrf.mxu0
      %v882 = vadd.f32 0.0, %v881
      %v883 = vpop.f32.mrf.mxu0
      %884 = vmatprep.mubr.f32.mxu0 0.0
      %885 = vmatmul.mubr.f32.gmra.mxu0 %v773
      %v886 = vpop.f32.mrf.mxu0
      %v887 = vadd.f32 0.0, %v886
      %v888 = vpop.f32.mrf.mxu0
      %889 = vdwg.mxu0
      %v890 = vmul.f32 %v556, %v842
      %v891 = vmul.f32 %v557, %v847
      %v892 = vmul.f32 %v558, %v852
      %v893 = vmul.f32 %v559, %v857
      %v894 = vmul.f32 %v560, %v862
      %v895 = vmul.f32 %v561, %v867
      %v896 = vmul.f32 %v562, %v872
      %v897 = vmul.f32 %v563, %v877
      %v898 = vmul.f32 %v564, %v882
      %v899 = vmul.f32 %v565, %v887
      %v901 = vsel %vm515, %v505, 0
      %v904 = vsel %vm515, %v506, 0
      %v907 = vsel %vm515, %v507, 0
      %v910 = vsel %vm515, %v508, 0
      %v913 = vsel %vm515, %v509, 0
      %v916 = vsel %vm515, %v510, 0
      %v919 = vsel %vm515, %v511, 0
      %v922 = vsel %vm515, %v512, 0
      %v925 = vsel %vm515, %v513, 0
      %v928 = vsel %vm515, %v514, 0
      %930 = vmatprep.subr.mxu0 0.0
      %931 = vmatpush1.msra.mxu0 0.0
      %932 = vmatprep.subr.mxu0 0.0
      %933 = vmatpush1.msra.mxu0 0.0
      %934 = vmatprep.subr.mxu0 0.0
      %935 = vmatpush1.msra.mxu0 0.0
      %936 = vmatprep.subr.mxu0 0.0
      %937 = vmatpush1.msra.mxu0 0.0
      %938 = vmatprep.subr.mxu0 0.0
      %939 = vmatpush1.msra.mxu0 0.0
      %940 = vmatprep.subr.mxu0 0.0
      %941 = vmatpush1.msra.mxu0 0.0
      %942 = vmatprep.subr.mxu0 0.0
      %943 = vmatpush1.msra.mxu0 %v899
      %944 = vmatprep.subr.mxu0 0.0
      %945 = vmatpush1.msra.mxu0 %v898
      %946 = vmatprep.subr.mxu0 0.0
      %947 = vmatpush1.msra.mxu0 %v897
      %948 = vmatprep.subr.mxu0 0.0
      %949 = vmatpush1.msra.mxu0 %v896
      %950 = vmatprep.subr.mxu0 0.0
      %951 = vmatpush1.msra.mxu0 %v895
      %952 = vmatprep.subr.mxu0 0.0
      %953 = vmatpush1.msra.mxu0 %v894
      %954 = vmatprep.subr.mxu0 0.0
      %955 = vmatpush1.msra.mxu0 %v893
      %956 = vmatprep.subr.mxu0 0.0
      %957 = vmatpush1.msra.mxu0 %v892
      %958 = vmatprep.subr.mxu0 0.0
      %959 = vmatpush1.msra.mxu0 %v891
      %960 = vmatprep.subr.mxu0 0.0
      %961 = vmatpush1.msra.mxu0 %v890
      %962 = vmatprep.subr.mxu0 0.0
      %963 = vmatpush2.msra.mxu0 0.0
      %964 = vmatprep.subr.mxu0 0.0
      %965 = vmatpush2.msra.mxu0 0.0
      %966 = vmatprep.subr.mxu0 0.0
      %967 = vmatpush2.msra.mxu0 0.0
      %968 = vmatprep.subr.mxu0 0.0
      %969 = vmatpush2.msra.mxu0 0.0
      %970 = vmatprep.subr.mxu0 0.0
      %971 = vmatpush2.msra.mxu0 0.0
      %972 = vmatprep.subr.mxu0 0.0
      %973 = vmatpush2.msra.mxu0 0.0
      %974 = vmatprep.subr.mxu0 0.0
      %975 = vmatpush2.msra.mxu0 0.0
      %976 = vmatprep.subr.mxu0 0.0
      %977 = vmatpush2.msra.mxu0 0.0
      %978 = vmatprep.subr.mxu0 0.0
      %979 = vmatpush2.msra.mxu0 0.0
      %980 = vmatprep.subr.mxu0 0.0
      %981 = vmatpush2.msra.mxu0 0.0
      %982 = vmatprep.subr.mxu0 0.0
      %983 = vmatpush2.msra.mxu0 0.0
      %984 = vmatprep.subr.mxu0 0.0
      %985 = vmatpush2.msra.mxu0 0.0
      %986 = vmatprep.subr.mxu0 0.0
      %987 = vmatpush2.msra.mxu0 0.0
      %988 = vmatprep.subr.mxu0 0.0
      %989 = vmatpush2.msra.mxu0 0.0
      %990 = vmatprep.subr.mxu0 0.0
      %991 = vmatpush2.msra.mxu0 0.0
      %992 = vmatprep.subr.mxu0 0.0
      %993 = vmatpush2.msra.mxu0 0.0
      %994 = vmatprep.mubr.f32.mxu0 0.0
      %995 = vmatmul.mubr.f32.gmra.mxu0 %v901
      %v996 = vpop.f32.mrf.mxu0
      %v997 = vadd.f32 0.0, %v996
      %v998 = vpop.f32.mrf.mxu0
      %999 = vmatprep.mubr.f32.mxu0 0.0
      %1000 = vmatmul.mubr.f32.gmra.mxu0 %v904
      %v1001 = vpop.f32.mrf.mxu0
      %v1002 = vadd.f32 0.0, %v1001
      %v1003 = vpop.f32.mrf.mxu0
      %1004 = vmatprep.mubr.f32.mxu0 0.0
      %1005 = vmatmul.mubr.f32.gmra.mxu0 %v907
      %v1006 = vpop.f32.mrf.mxu0
      %v1007 = vadd.f32 0.0, %v1006
      %v1008 = vpop.f32.mrf.mxu0
      %1009 = vmatprep.mubr.f32.mxu0 0.0
      %1010 = vmatmul.mubr.f32.gmra.mxu0 %v910
      %v1011 = vpop.f32.mrf.mxu0
      %v1012 = vadd.f32 0.0, %v1011
      %v1013 = vpop.f32.mrf.mxu0
      %1014 = vmatprep.mubr.f32.mxu0 0.0
      %1015 = vmatmul.mubr.f32.gmra.mxu0 %v913
      %v1016 = vpop.f32.mrf.mxu0
      %v1017 = vadd.f32 0.0, %v1016
      %v1018 = vpop.f32.mrf.mxu0
      %1019 = vmatprep.mubr.f32.mxu0 0.0
      %1020 = vmatmul.mubr.f32.gmra.mxu0 %v916
      %v1021 = vpop.f32.mrf.mxu0
      %v1022 = vadd.f32 0.0, %v1021
      %v1023 = vpop.f32.mrf.mxu0
      %1024 = vmatprep.mubr.f32.mxu0 0.0
      %1025 = vmatmul.mubr.f32.gmra.mxu0 %v919
      %v1026 = vpop.f32.mrf.mxu0
      %v1027 = vadd.f32 0.0, %v1026
      %v1028 = vpop.f32.mrf.mxu0
      %1029 = vmatprep.mubr.f32.mxu0 0.0
      %1030 = vmatmul.mubr.f32.gmra.mxu0 %v922
      %v1031 = vpop.f32.mrf.mxu0
      %v1032 = vadd.f32 0.0, %v1031
      %v1033 = vpop.f32.mrf.mxu0
      %1034 = vmatprep.mubr.f32.mxu0 0.0
      %1035 = vmatmul.mubr.f32.gmra.mxu0 %v925
      %v1036 = vpop.f32.mrf.mxu0
      %v1037 = vadd.f32 0.0, %v1036
      %v1038 = vpop.f32.mrf.mxu0
      %1039 = vmatprep.mubr.f32.mxu0 0.0
      %1040 = vmatmul.mubr.f32.gmra.mxu0 %v928
      %v1041 = vpop.f32.mrf.mxu0
      %v1042 = vadd.f32 0.0, %v1041
      %v1043 = vpop.f32.mrf.mxu0
      %1044 = vdwg.mxu0
      %v1045 = vmul.f32 %v556, %v997
      %v1046 = vmul.f32 %v557, %v1002
      %v1047 = vmul.f32 %v558, %v1007
      %v1048 = vmul.f32 %v559, %v1012
      %v1049 = vmul.f32 %v560, %v1017
      %v1050 = vmul.f32 %v561, %v1022
      %v1051 = vmul.f32 %v562, %v1027
      %v1052 = vmul.f32 %v563, %v1032
      %v1053 = vmul.f32 %v564, %v1037
      %v1054 = vmul.f32 %v565, %v1042
      %v1055 = vld [vmem:[%s5] sm:$0x1]
      %v1057 = vlaneseq
      %v1058 = vshrl.u32 %v1057, 7
      %v1059 = vsub.s32 0, %v1058
      %v1060 = vrot.slane %v1055, %v1059
      %v1062 = vadd.f32 %v1045, %v1060
      %v1063 = vadd.f32 %v1046, %v1060
      %v1064 = vadd.f32 %v1047, %v1060
      %v1065 = vadd.f32 %v1048, %v1060
      %v1066 = vadd.f32 %v1049, %v1060
      %v1067 = vadd.f32 %v1050, %v1060
      %v1068 = vadd.f32 %v1051, %v1060
      %v1069 = vadd.f32 %v1052, %v1060
      %v1070 = vadd.f32 %v1053, %v1060
      %v1071 = vadd.f32 %v1054, %v1060
      %v1072 = vld [vmem:[%s6] sm:$0xff]
      %v1073 = vld [vmem:[%s6 + $0x8] sm:$0xff]
      %v1074 = vld [vmem:[%s6 + $0x10] sm:$0xff]
      %v1075 = vld [vmem:[%s6 + $0x18] sm:$0xff]
      %v1076 = vmax.f32 %v1062, 0.0
      %v1077 = vmax.f32 %v1063, 0.0
      %v1078 = vmax.f32 %v1064, 0.0
      %v1079 = vmax.f32 %v1065, 0.0
      %v1080 = vmax.f32 %v1066, 0.0
      %v1081 = vmax.f32 %v1067, 0.0
      %v1082 = vmax.f32 %v1068, 0.0
      %v1083 = vmax.f32 %v1069, 0.0
      %v1084 = vmax.f32 %v1070, 0.0
      %v1085 = vmax.f32 %v1071, 0.0
      %v1086 = vld [vmem:[%s7] sm:$0xff]
      %v1087 = vld [vmem:[%s7 + $0x8] sm:$0xff]
      %v1088 = vld [vmem:[%s7 + $0x10] sm:$0xff]
      %v1089 = vld [vmem:[%s7 + $0x18] sm:$0xff]
      %v1091 = vsel %vm744, %v1076, 0
      %v1094 = vsel %vm744, %v1077, 0
      %v1097 = vsel %vm744, %v1078, 0
      %v1100 = vsel %vm744, %v1079, 0
      %v1103 = vsel %vm744, %v1080, 0
      %v1106 = vsel %vm744, %v1081, 0
      %v1109 = vsel %vm744, %v1082, 0
      %v1112 = vsel %vm744, %v1083, 0
      %v1115 = vsel %vm744, %v1084, 0
      %v1118 = vsel %vm744, %v1085, 0
      %1120 = vmatprep.subr.mxu0 0.0
      %1121 = vmatpush1.msra.mxu0 0.0
      %1122 = vmatprep.subr.mxu0 0.0
      %1123 = vmatpush1.msra.mxu0 0.0
      %1124 = vmatprep.subr.mxu0 0.0
      %1125 = vmatpush1.msra.mxu0 0.0
      %1126 = vmatprep.subr.mxu0 0.0
      %1127 = vmatpush1.msra.mxu0 0.0
      %1128 = vmatprep.subr.mxu0 0.0
      %1129 = vmatpush1.msra.mxu0 0.0
      %1130 = vmatprep.subr.mxu0 0.0
      %1131 = vmatpush1.msra.mxu0 0.0
      %1132 = vmatprep.subr.mxu0 0.0
      %1133 = vmatpush1.msra.mxu0 0.0
      %1134 = vmatprep.subr.mxu0 0.0
      %1135 = vmatpush1.msra.mxu0 0.0
      %1136 = vmatprep.subr.mxu0 0.0
      %1137 = vmatpush1.msra.mxu0 0.0
      %1138 = vmatprep.subr.mxu0 0.0
      %1139 = vmatpush1.msra.mxu0 0.0
      %1140 = vmatprep.subr.mxu0 0.0
      %1141 = vmatpush1.msra.mxu0 0.0
      %1142 = vmatprep.subr.mxu0 0.0
      %1143 = vmatpush1.msra.mxu0 0.0
      %1144 = vmatprep.subr.mxu0 0.0
      %1145 = vmatpush1.msra.mxu0 %v1089
      %1146 = vmatprep.subr.mxu0 0.0
      %1147 = vmatpush1.msra.mxu0 %v1088
      %1148 = vmatprep.subr.mxu0 0.0
      %1149 = vmatpush1.msra.mxu0 %v1087
      %1150 = vmatprep.subr.mxu0 0.0
      %1151 = vmatpush1.msra.mxu0 %v1086
      %1152 = vmatprep.subr.mxu0 0.0
      %1153 = vmatpush2.msra.mxu0 0.0
      %1154 = vmatprep.subr.mxu0 0.0
      %1155 = vmatpush2.msra.mxu0 0.0
      %1156 = vmatprep.subr.mxu0 0.0
      %1157 = vmatpush2.msra.mxu0 0.0
      %1158 = vmatprep.subr.mxu0 0.0
      %1159 = vmatpush2.msra.mxu0 0.0
      %1160 = vmatprep.subr.mxu0 0.0
      %1161 = vmatpush2.msra.mxu0 0.0
      %1162 = vmatprep.subr.mxu0 0.0
      %1163 = vmatpush2.msra.mxu0 0.0
      %1164 = vmatprep.subr.mxu0 0.0
      %1165 = vmatpush2.msra.mxu0 0.0
      %1166 = vmatprep.subr.mxu0 0.0
      %1167 = vmatpush2.msra.mxu0 0.0
      %1168 = vmatprep.subr.mxu0 0.0
      %1169 = vmatpush2.msra.mxu0 0.0
      %1170 = vmatprep.subr.mxu0 0.0
      %1171 = vmatpush2.msra.mxu0 0.0
      %1172 = vmatprep.subr.mxu0 0.0
      %1173 = vmatpush2.msra.mxu0 0.0
      %1174 = vmatprep.subr.mxu0 0.0
      %1175 = vmatpush2.msra.mxu0 0.0
      %1176 = vmatprep.subr.mxu0 0.0
      %1177 = vmatpush2.msra.mxu0 0.0
      %1178 = vmatprep.subr.mxu0 0.0
      %1179 = vmatpush2.msra.mxu0 0.0
      %1180 = vmatprep.subr.mxu0 0.0
      %1181 = vmatpush2.msra.mxu0 0.0
      %1182 = vmatprep.subr.mxu0 0.0
      %1183 = vmatpush2.msra.mxu0 0.0
      %1184 = vmatprep.mubr.f32.mxu0 0.0
      %1185 = vmatmul.mubr.f32.gmra.mxu0 %v1091
      %v1186 = vpop.f32.mrf.mxu0
      %v1187 = vadd.f32 0.0, %v1186
      %v1188 = vpop.f32.mrf.mxu0
      %1189 = vmatprep.mubr.f32.mxu0 0.0
      %1190 = vmatmul.mubr.f32.gmra.mxu0 %v1094
      %v1191 = vpop.f32.mrf.mxu0
      %v1192 = vadd.f32 0.0, %v1191
      %v1193 = vpop.f32.mrf.mxu0
      %1194 = vmatprep.mubr.f32.mxu0 0.0
      %1195 = vmatmul.mubr.f32.gmra.mxu0 %v1097
      %v1196 = vpop.f32.mrf.mxu0
      %v1197 = vadd.f32 0.0, %v1196
      %v1198 = vpop.f32.mrf.mxu0
      %1199 = vmatprep.mubr.f32.mxu0 0.0
      %1200 = vmatmul.mubr.f32.gmra.mxu0 %v1100
      %v1201 = vpop.f32.mrf.mxu0
      %v1202 = vadd.f32 0.0, %v1201
      %v1203 = vpop.f32.mrf.mxu0
      %1204 = vmatprep.mubr.f32.mxu0 0.0
      %1205 = vmatmul.mubr.f32.gmra.mxu0 %v1103
      %v1206 = vpop.f32.mrf.mxu0
      %v1207 = vadd.f32 0.0, %v1206
      %v1208 = vpop.f32.mrf.mxu0
      %1209 = vmatprep.mubr.f32.mxu0 0.0
      %1210 = vmatmul.mubr.f32.gmra.mxu0 %v1106
      %v1211 = vpop.f32.mrf.mxu0
      %v1212 = vadd.f32 0.0, %v1211
      %v1213 = vpop.f32.mrf.mxu0
      %1214 = vmatprep.mubr.f32.mxu0 0.0
      %1215 = vmatmul.mubr.f32.gmra.mxu0 %v1109
      %v1216 = vpop.f32.mrf.mxu0
      %v1217 = vadd.f32 0.0, %v1216
      %v1218 = vpop.f32.mrf.mxu0
      %1219 = vmatprep.mubr.f32.mxu0 0.0
      %1220 = vmatmul.mubr.f32.gmra.mxu0 %v1112
      %v1221 = vpop.f32.mrf.mxu0
      %v1222 = vadd.f32 0.0, %v1221
      %v1223 = vpop.f32.mrf.mxu0
      %1224 = vmatprep.mubr.f32.mxu0 0.0
      %1225 = vmatmul.mubr.f32.gmra.mxu0 %v1115
      %v1226 = vpop.f32.mrf.mxu0
      %v1227 = vadd.f32 0.0, %v1226
      %v1228 = vpop.f32.mrf.mxu0
      %1229 = vmatprep.mubr.f32.mxu0 0.0
      %1230 = vmatmul.mubr.f32.gmra.mxu0 %v1118
      %v1231 = vpop.f32.mrf.mxu0
      %v1232 = vadd.f32 0.0, %v1231
      %v1233 = vpop.f32.mrf.mxu0
      %1234 = vdwg.mxu0
      %1235 = vmatprep.subr.mxu0 0.0
      %1236 = vmatpush1.msra.mxu0 0.0
      %1237 = vmatprep.subr.mxu0 0.0
      %1238 = vmatpush1.msra.mxu0 0.0
      %1239 = vmatprep.subr.mxu0 0.0
      %1240 = vmatpush1.msra.mxu0 0.0
      %1241 = vmatprep.subr.mxu0 0.0
      %1242 = vmatpush1.msra.mxu0 0.0
      %1243 = vmatprep.subr.mxu0 0.0
      %1244 = vmatpush1.msra.mxu0 0.0
      %1245 = vmatprep.subr.mxu0 0.0
      %1246 = vmatpush1.msra.mxu0 0.0
      %1247 = vmatprep.subr.mxu0 0.0
      %1248 = vmatpush1.msra.mxu0 0.0
      %1249 = vmatprep.subr.mxu0 0.0
      %1250 = vmatpush1.msra.mxu0 0.0
      %1251 = vmatprep.subr.mxu0 0.0
      %1252 = vmatpush1.msra.mxu0 0.0
      %1253 = vmatprep.subr.mxu0 0.0
      %1254 = vmatpush1.msra.mxu0 0.0
      %1255 = vmatprep.subr.mxu0 0.0
      %1256 = vmatpush1.msra.mxu0 0.0
      %1257 = vmatprep.subr.mxu0 0.0
      %1258 = vmatpush1.msra.mxu0 0.0
      %1259 = vmatprep.subr.mxu0 0.0
      %1260 = vmatpush1.msra.mxu0 %v1075
      %1261 = vmatprep.subr.mxu0 0.0
      %1262 = vmatpush1.msra.mxu0 %v1074
      %1263 = vmatprep.subr.mxu0 0.0
      %1264 = vmatpush1.msra.mxu0 %v1073
      %1265 = vmatprep.subr.mxu0 0.0
      %1266 = vmatpush1.msra.mxu0 %v1072
      %1267 = vmatprep.subr.mxu0 0.0
      %1268 = vmatpush2.msra.mxu0 0.0
      %1269 = vmatprep.subr.mxu0 0.0
      %1270 = vmatpush2.msra.mxu0 0.0
      %1271 = vmatprep.subr.mxu0 0.0
      %1272 = vmatpush2.msra.mxu0 0.0
      %1273 = vmatprep.subr.mxu0 0.0
      %1274 = vmatpush2.msra.mxu0 0.0
      %1275 = vmatprep.subr.mxu0 0.0
      %1276 = vmatpush2.msra.mxu0 0.0
      %1277 = vmatprep.subr.mxu0 0.0
      %1278 = vmatpush2.msra.mxu0 0.0
      %1279 = vmatprep.subr.mxu0 0.0
      %1280 = vmatpush2.msra.mxu0 0.0
      %1281 = vmatprep.subr.mxu0 0.0
      %1282 = vmatpush2.msra.mxu0 0.0
      %1283 = vmatprep.subr.mxu0 0.0
      %1284 = vmatpush2.msra.mxu0 0.0
      %1285 = vmatprep.subr.mxu0 0.0
      %1286 = vmatpush2.msra.mxu0 0.0
      %1287 = vmatprep.subr.mxu0 0.0
      %1288 = vmatpush2.msra.mxu0 0.0
      %1289 = vmatprep.subr.mxu0 0.0
      %1290 = vmatpush2.msra.mxu0 0.0
      %1291 = vmatprep.subr.mxu0 0.0
      %1292 = vmatpush2.msra.mxu0 0.0
      %1293 = vmatprep.subr.mxu0 0.0
      %1294 = vmatpush2.msra.mxu0 0.0
      %1295 = vmatprep.subr.mxu0 0.0
      %1296 = vmatpush2.msra.mxu0 0.0
      %1297 = vmatprep.subr.mxu0 0.0
      %1298 = vmatpush2.msra.mxu0 0.0
      %1299 = vmatprep.mubr.f32.mxu0 0.0
      %1300 = vmatmul.mubr.f32.gmra.mxu0 %v746
      %v1301 = vpop.f32.mrf.mxu0
      %v1302 = vadd.f32 %v1187, %v1301
      %v1303 = vpop.f32.mrf.mxu0
      %1304 = vmatprep.mubr.f32.mxu0 0.0
      %1305 = vmatmul.mubr.f32.gmra.mxu0 %v749
      %v1306 = vpop.f32.mrf.mxu0
      %v1307 = vadd.f32 %v1192, %v1306
      %v1308 = vpop.f32.mrf.mxu0
      %1309 = vmatprep.mubr.f32.mxu0 0.0
      %1310 = vmatmul.mubr.f32.gmra.mxu0 %v752
      %v1311 = vpop.f32.mrf.mxu0
      %v1312 = vadd.f32 %v1197, %v1311
      %v1313 = vpop.f32.mrf.mxu0
      %1314 = vmatprep.mubr.f32.mxu0 0.0
      %1315 = vmatmul.mubr.f32.gmra.mxu0 %v755
      %v1316 = vpop.f32.mrf.mxu0
      %v1317 = vadd.f32 %v1202, %v1316
      %v1318 = vpop.f32.mrf.mxu0
      %1319 = vmatprep.mubr.f32.mxu0 0.0
      %1320 = vmatmul.mubr.f32.gmra.mxu0 %v758
      %v1321 = vpop.f32.mrf.mxu0
      %v1322 = vadd.f32 %v1207, %v1321
      %v1323 = vpop.f32.mrf.mxu0
      %1324 = vmatprep.mubr.f32.mxu0 0.0
      %1325 = vmatmul.mubr.f32.gmra.mxu0 %v761
      %v1326 = vpop.f32.mrf.mxu0
      %v1327 = vadd.f32 %v1212, %v1326
      %v1328 = vpop.f32.mrf.mxu0
      %1329 = vmatprep.mubr.f32.mxu0 0.0
      %1330 = vmatmul.mubr.f32.gmra.mxu0 %v764
      %v1331 = vpop.f32.mrf.mxu0
      %v1332 = vadd.f32 %v1217, %v1331
      %v1333 = vpop.f32.mrf.mxu0
      %1334 = vmatprep.mubr.f32.mxu0 0.0
      %1335 = vmatmul.mubr.f32.gmra.mxu0 %v767
      %v1336 = vpop.f32.mrf.mxu0
      %v1337 = vadd.f32 %v1222, %v1336
      %v1338 = vpop.f32.mrf.mxu0
      %1339 = vmatprep.mubr.f32.mxu0 0.0
      %1340 = vmatmul.mubr.f32.gmra.mxu0 %v770
      %v1341 = vpop.f32.mrf.mxu0
      %v1342 = vadd.f32 %v1227, %v1341
      %v1343 = vpop.f32.mrf.mxu0
      %1344 = vmatprep.mubr.f32.mxu0 0.0
      %1345 = vmatmul.mubr.f32.gmra.mxu0 %v773
      %v1346 = vpop.f32.mrf.mxu0
      %v1347 = vadd.f32 %v1232, %v1346
      %v1348 = vpop.f32.mrf.mxu0
      %1349 = vdwg.mxu0
      %v1350 = vld [vmem:[%s8] sm:$0x1]
      %v1352 = vlaneseq
      %v1353 = vshrl.u32 %v1352, 7
      %v1354 = vsub.s32 0, %v1353
      %v1355 = vrot.slane %v1350, %v1354
      %v1357 = vadd.f32 %v1302, %v1355
      %v1358 = vadd.f32 %v1307, %v1355
      %v1359 = vadd.f32 %v1312, %v1355
      %v1360 = vadd.f32 %v1317, %v1355
      %v1361 = vadd.f32 %v1322, %v1355
      %v1362 = vadd.f32 %v1327, %v1355
      %v1363 = vadd.f32 %v1332, %v1355
      %v1364 = vadd.f32 %v1337, %v1355
      %v1365 = vadd.f32 %v1342, %v1355
      %v1366 = vadd.f32 %v1347, %v1355
      %v1367 = vmax.f32 %v1357, 0.0
      %v1368 = vmax.f32 %v1358, 0.0
      %v1369 = vmax.f32 %v1359, 0.0
      %v1370 = vmax.f32 %v1360, 0.0
      %v1371 = vmax.f32 %v1361, 0.0
      %v1372 = vmax.f32 %v1362, 0.0
      %v1373 = vmax.f32 %v1363, 0.0
      %v1374 = vmax.f32 %v1364, 0.0
      %v1375 = vmax.f32 %v1365, 0.0
      %v1376 = vmax.f32 %v1366, 0.0
      %v1377 = vld [vmem:[%s9] sm:$0xff]
      %v1378 = vld [vmem:[%s9 + $0x8] sm:$0xff]
      %v1379 = vld [vmem:[%s9 + $0x10] sm:$0xff]
      %v1380 = vld [vmem:[%s9 + $0x18] sm:$0xff]
      %v1382 = vsel %vm744, %v1367, 0
      %v1385 = vsel %vm744, %v1368, 0
      %v1388 = vsel %vm744, %v1369, 0
      %v1391 = vsel %vm744, %v1370, 0
      %v1394 = vsel %vm744, %v1371, 0
      %v1397 = vsel %vm744, %v1372, 0
      %v1400 = vsel %vm744, %v1373, 0
      %v1403 = vsel %vm744, %v1374, 0
      %v1406 = vsel %vm744, %v1375, 0
      %v1409 = vsel %vm744, %v1376, 0
      %1411 = vmatprep.subr.mxu0 0.0
      %1412 = vmatpush1.msra.mxu0 0.0
      %1413 = vmatprep.subr.mxu0 0.0
      %1414 = vmatpush1.msra.mxu0 0.0
      %1415 = vmatprep.subr.mxu0 0.0
      %1416 = vmatpush1.msra.mxu0 0.0
      %1417 = vmatprep.subr.mxu0 0.0
      %1418 = vmatpush1.msra.mxu0 0.0
      %1419 = vmatprep.subr.mxu0 0.0
      %1420 = vmatpush1.msra.mxu0 0.0
      %1421 = vmatprep.subr.mxu0 0.0
      %1422 = vmatpush1.msra.mxu0 0.0
      %1423 = vmatprep.subr.mxu0 0.0
      %1424 = vmatpush1.msra.mxu0 0.0
      %1425 = vmatprep.subr.mxu0 0.0
      %1426 = vmatpush1.msra.mxu0 0.0
      %1427 = vmatprep.subr.mxu0 0.0
      %1428 = vmatpush1.msra.mxu0 0.0
      %1429 = vmatprep.subr.mxu0 0.0
      %1430 = vmatpush1.msra.mxu0 0.0
      %1431 = vmatprep.subr.mxu0 0.0
      %1432 = vmatpush1.msra.mxu0 0.0
      %1433 = vmatprep.subr.mxu0 0.0
      %1434 = vmatpush1.msra.mxu0 0.0
      %1435 = vmatprep.subr.mxu0 0.0
      %1436 = vmatpush1.msra.mxu0 %v1380
      %1437 = vmatprep.subr.mxu0 0.0
      %1438 = vmatpush1.msra.mxu0 %v1379
      %1439 = vmatprep.subr.mxu0 0.0
      %1440 = vmatpush1.msra.mxu0 %v1378
      %1441 = vmatprep.subr.mxu0 0.0
      %1442 = vmatpush1.msra.mxu0 %v1377
      %1443 = vmatprep.subr.mxu0 0.0
      %1444 = vmatpush2.msra.mxu0 0.0
      %1445 = vmatprep.subr.mxu0 0.0
      %1446 = vmatpush2.msra.mxu0 0.0
      %1447 = vmatprep.subr.mxu0 0.0
      %1448 = vmatpush2.msra.mxu0 0.0
      %1449 = vmatprep.subr.mxu0 0.0
      %1450 = vmatpush2.msra.mxu0 0.0
      %1451 = vmatprep.subr.mxu0 0.0
      %1452 = vmatpush2.msra.mxu0 0.0
      %1453 = vmatprep.subr.mxu0 0.0
      %1454 = vmatpush2.msra.mxu0 0.0
      %1455 = vmatprep.subr.mxu0 0.0
      %1456 = vmatpush2.msra.mxu0 0.0
      %1457 = vmatprep.subr.mxu0 0.0
      %1458 = vmatpush2.msra.mxu0 0.0
      %1459 = vmatprep.subr.mxu0 0.0
      %1460 = vmatpush2.msra.mxu0 0.0
      %1461 = vmatprep.subr.mxu0 0.0
      %1462 = vmatpush2.msra.mxu0 0.0
      %1463 = vmatprep.subr.mxu0 0.0
      %1464 = vmatpush2.msra.mxu0 0.0
      %1465 = vmatprep.subr.mxu0 0.0
      %1466 = vmatpush2.msra.mxu0 0.0
      %1467 = vmatprep.subr.mxu0 0.0
      %1468 = vmatpush2.msra.mxu0 0.0
      %1469 = vmatprep.subr.mxu0 0.0
      %1470 = vmatpush2.msra.mxu0 0.0
      %1471 = vmatprep.subr.mxu0 0.0
      %1472 = vmatpush2.msra.mxu0 0.0
      %1473 = vmatprep.subr.mxu0 0.0
      %1474 = vmatpush2.msra.mxu0 0.0
      %1475 = vmatprep.mubr.f32.mxu0 0.0
      %1476 = vmatmul.mubr.f32.gmra.mxu0 %v1382
      %v1477 = vpop.f32.mrf.mxu0
      %v1478 = vadd.f32 0.0, %v1477
      %v1479 = vpop.f32.mrf.mxu0
      %1480 = vmatprep.mubr.f32.mxu0 0.0
      %1481 = vmatmul.mubr.f32.gmra.mxu0 %v1385
      %v1482 = vpop.f32.mrf.mxu0
      %v1483 = vadd.f32 0.0, %v1482
      %v1484 = vpop.f32.mrf.mxu0
      %1485 = vmatprep.mubr.f32.mxu0 0.0
      %1486 = vmatmul.mubr.f32.gmra.mxu0 %v1388
      %v1487 = vpop.f32.mrf.mxu0
      %v1488 = vadd.f32 0.0, %v1487
      %v1489 = vpop.f32.mrf.mxu0
      %1490 = vmatprep.mubr.f32.mxu0 0.0
      %1491 = vmatmul.mubr.f32.gmra.mxu0 %v1391
      %v1492 = vpop.f32.mrf.mxu0
      %v1493 = vadd.f32 0.0, %v1492
      %v1494 = vpop.f32.mrf.mxu0
      %1495 = vmatprep.mubr.f32.mxu0 0.0
      %1496 = vmatmul.mubr.f32.gmra.mxu0 %v1394
      %v1497 = vpop.f32.mrf.mxu0
      %v1498 = vadd.f32 0.0, %v1497
      %v1499 = vpop.f32.mrf.mxu0
      %1500 = vmatprep.mubr.f32.mxu0 0.0
      %1501 = vmatmul.mubr.f32.gmra.mxu0 %v1397
      %v1502 = vpop.f32.mrf.mxu0
      %v1503 = vadd.f32 0.0, %v1502
      %v1504 = vpop.f32.mrf.mxu0
      %1505 = vmatprep.mubr.f32.mxu0 0.0
      %1506 = vmatmul.mubr.f32.gmra.mxu0 %v1400
      %v1507 = vpop.f32.mrf.mxu0
      %v1508 = vadd.f32 0.0, %v1507
      %v1509 = vpop.f32.mrf.mxu0
      %1510 = vmatprep.mubr.f32.mxu0 0.0
      %1511 = vmatmul.mubr.f32.gmra.mxu0 %v1403
      %v1512 = vpop.f32.mrf.mxu0
      %v1513 = vadd.f32 0.0, %v1512
      %v1514 = vpop.f32.mrf.mxu0
      %1515 = vmatprep.mubr.f32.mxu0 0.0
      %1516 = vmatmul.mubr.f32.gmra.mxu0 %v1406
      %v1517 = vpop.f32.mrf.mxu0
      %v1518 = vadd.f32 0.0, %v1517
      %v1519 = vpop.f32.mrf.mxu0
      %1520 = vmatprep.mubr.f32.mxu0 0.0
      %1521 = vmatmul.mubr.f32.gmra.mxu0 %v1409
      %v1522 = vpop.f32.mrf.mxu0
      %v1523 = vadd.f32 0.0, %v1522
      %v1524 = vpop.f32.mrf.mxu0
      %1525 = vdwg.mxu0
      %v1526 = vmul.f32 %v556, %v1478
      %v1527 = vmul.f32 %v557, %v1483
      %v1528 = vmul.f32 %v558, %v1488
      %v1529 = vmul.f32 %v559, %v1493
      %v1530 = vmul.f32 %v560, %v1498
      %v1531 = vmul.f32 %v561, %v1503
      %v1532 = vmul.f32 %v562, %v1508
      %v1533 = vmul.f32 %v563, %v1513
      %v1534 = vmul.f32 %v564, %v1518
      %v1535 = vmul.f32 %v565, %v1523
      %1536 = vmatprep.subr.mxu0 0.0
      %1537 = vmatpush1.msra.mxu0 0.0
      %1538 = vmatprep.subr.mxu0 0.0
      %1539 = vmatpush1.msra.mxu0 0.0
      %1540 = vmatprep.subr.mxu0 0.0
      %1541 = vmatpush1.msra.mxu0 0.0
      %1542 = vmatprep.subr.mxu0 0.0
      %1543 = vmatpush1.msra.mxu0 0.0
      %1544 = vmatprep.subr.mxu0 0.0
      %1545 = vmatpush1.msra.mxu0 0.0
      %1546 = vmatprep.subr.mxu0 0.0
      %1547 = vmatpush1.msra.mxu0 0.0
      %1548 = vmatprep.subr.mxu0 0.0
      %1549 = vmatpush1.msra.mxu0 %v1535
      %1550 = vmatprep.subr.mxu0 0.0
      %1551 = vmatpush1.msra.mxu0 %v1534
      %1552 = vmatprep.subr.mxu0 0.0
      %1553 = vmatpush1.msra.mxu0 %v1533
      %1554 = vmatprep.subr.mxu0 0.0
      %1555 = vmatpush1.msra.mxu0 %v1532
      %1556 = vmatprep.subr.mxu0 0.0
      %1557 = vmatpush1.msra.mxu0 %v1531
      %1558 = vmatprep.subr.mxu0 0.0
      %1559 = vmatpush1.msra.mxu0 %v1530
      %1560 = vmatprep.subr.mxu0 0.0
      %1561 = vmatpush1.msra.mxu0 %v1529
      %1562 = vmatprep.subr.mxu0 0.0
      %1563 = vmatpush1.msra.mxu0 %v1528
      %1564 = vmatprep.subr.mxu0 0.0
      %1565 = vmatpush1.msra.mxu0 %v1527
      %1566 = vmatprep.subr.mxu0 0.0
      %1567 = vmatpush1.msra.mxu0 %v1526
      %1568 = vmatprep.subr.mxu0 0.0
      %1569 = vmatpush2.msra.mxu0 0.0
      %1570 = vmatprep.subr.mxu0 0.0
      %1571 = vmatpush2.msra.mxu0 0.0
      %1572 = vmatprep.subr.mxu0 0.0
      %1573 = vmatpush2.msra.mxu0 0.0
      %1574 = vmatprep.subr.mxu0 0.0
      %1575 = vmatpush2.msra.mxu0 0.0
      %1576 = vmatprep.subr.mxu0 0.0
      %1577 = vmatpush2.msra.mxu0 0.0
      %1578 = vmatprep.subr.mxu0 0.0
      %1579 = vmatpush2.msra.mxu0 0.0
      %1580 = vmatprep.subr.mxu0 0.0
      %1581 = vmatpush2.msra.mxu0 0.0
      %1582 = vmatprep.subr.mxu0 0.0
      %1583 = vmatpush2.msra.mxu0 0.0
      %1584 = vmatprep.subr.mxu0 0.0
      %1585 = vmatpush2.msra.mxu0 0.0
      %1586 = vmatprep.subr.mxu0 0.0
      %1587 = vmatpush2.msra.mxu0 0.0
      %1588 = vmatprep.subr.mxu0 0.0
      %1589 = vmatpush2.msra.mxu0 0.0
      %1590 = vmatprep.subr.mxu0 0.0
      %1591 = vmatpush2.msra.mxu0 0.0
      %1592 = vmatprep.subr.mxu0 0.0
      %1593 = vmatpush2.msra.mxu0 0.0
      %1594 = vmatprep.subr.mxu0 0.0
      %1595 = vmatpush2.msra.mxu0 0.0
      %1596 = vmatprep.subr.mxu0 0.0
      %1597 = vmatpush2.msra.mxu0 0.0
      %1598 = vmatprep.subr.mxu0 0.0
      %1599 = vmatpush2.msra.mxu0 0.0
      %1600 = vmatprep.mubr.f32.mxu0 0.0
      %1601 = vmatmul.mubr.f32.gmra.mxu0 %v901
      %v1602 = vpop.f32.mrf.mxu0
      %v1603 = vadd.f32 0.0, %v1602
      %v1604 = vpop.f32.mrf.mxu0
      %1605 = vmatprep.mubr.f32.mxu0 0.0
      %1606 = vmatmul.mubr.f32.gmra.mxu0 %v904
      %v1607 = vpop.f32.mrf.mxu0
      %v1608 = vadd.f32 0.0, %v1607
      %v1609 = vpop.f32.mrf.mxu0
      %1610 = vmatprep.mubr.f32.mxu0 0.0
      %1611 = vmatmul.mubr.f32.gmra.mxu0 %v907
      %v1612 = vpop.f32.mrf.mxu0
      %v1613 = vadd.f32 0.0, %v1612
      %v1614 = vpop.f32.mrf.mxu0
      %1615 = vmatprep.mubr.f32.mxu0 0.0
      %1616 = vmatmul.mubr.f32.gmra.mxu0 %v910
      %v1617 = vpop.f32.mrf.mxu0
      %v1618 = vadd.f32 0.0, %v1617
      %v1619 = vpop.f32.mrf.mxu0
      %1620 = vmatprep.mubr.f32.mxu0 0.0
      %1621 = vmatmul.mubr.f32.gmra.mxu0 %v913
      %v1622 = vpop.f32.mrf.mxu0
      %v1623 = vadd.f32 0.0, %v1622
      %v1624 = vpop.f32.mrf.mxu0
      %1625 = vmatprep.mubr.f32.mxu0 0.0
      %1626 = vmatmul.mubr.f32.gmra.mxu0 %v916
      %v1627 = vpop.f32.mrf.mxu0
      %v1628 = vadd.f32 0.0, %v1627
      %v1629 = vpop.f32.mrf.mxu0
      %1630 = vmatprep.mubr.f32.mxu0 0.0
      %1631 = vmatmul.mubr.f32.gmra.mxu0 %v919
      %v1632 = vpop.f32.mrf.mxu0
      %v1633 = vadd.f32 0.0, %v1632
      %v1634 = vpop.f32.mrf.mxu0
      %1635 = vmatprep.mubr.f32.mxu0 0.0
      %1636 = vmatmul.mubr.f32.gmra.mxu0 %v922
      %v1637 = vpop.f32.mrf.mxu0
      %v1638 = vadd.f32 0.0, %v1637
      %v1639 = vpop.f32.mrf.mxu0
      %1640 = vmatprep.mubr.f32.mxu0 0.0
      %1641 = vmatmul.mubr.f32.gmra.mxu0 %v925
      %v1642 = vpop.f32.mrf.mxu0
      %v1643 = vadd.f32 0.0, %v1642
      %v1644 = vpop.f32.mrf.mxu0
      %1645 = vmatprep.mubr.f32.mxu0 0.0
      %1646 = vmatmul.mubr.f32.gmra.mxu0 %v928
      %v1647 = vpop.f32.mrf.mxu0
      %v1648 = vadd.f32 0.0, %v1647
      %v1649 = vpop.f32.mrf.mxu0
      %1650 = vdwg.mxu0
      %v1651 = vmul.f32 %v556, %v1603
      %v1652 = vmul.f32 %v557, %v1608
      %v1653 = vmul.f32 %v558, %v1613
      %v1654 = vmul.f32 %v559, %v1618
      %v1655 = vmul.f32 %v560, %v1623
      %v1656 = vmul.f32 %v561, %v1628
      %v1657 = vmul.f32 %v562, %v1633
      %v1658 = vmul.f32 %v563, %v1638
      %v1659 = vmul.f32 %v564, %v1643
      %v1660 = vmul.f32 %v565, %v1648
      %v1661 = vld [vmem:[%s10] sm:$0x1]
      %v1663 = vlaneseq
      %v1664 = vshrl.u32 %v1663, 7
      %v1665 = vsub.s32 0, %v1664
      %v1666 = vrot.slane %v1661, %v1665
      %v1668 = vadd.f32 %v1651, %v1666
      %v1669 = vadd.f32 %v1652, %v1666
      %v1670 = vadd.f32 %v1653, %v1666
      %v1671 = vadd.f32 %v1654, %v1666
      %v1672 = vadd.f32 %v1655, %v1666
      %v1673 = vadd.f32 %v1656, %v1666
      %v1674 = vadd.f32 %v1657, %v1666
      %v1675 = vadd.f32 %v1658, %v1666
      %v1676 = vadd.f32 %v1659, %v1666
      %v1677 = vadd.f32 %v1660, %v1666
      %v1678 = vld [vmem:[%s11] sm:$0xff]
      %v1679 = vld [vmem:[%s11 + $0x8] sm:$0xff]
      %v1680 = vld [vmem:[%s11 + $0x10] sm:$0xff]
      %v1681 = vld [vmem:[%s11 + $0x18] sm:$0xff]
      %v1682 = vmax.f32 %v1668, 0.0
      %v1683 = vmax.f32 %v1669, 0.0
      %v1684 = vmax.f32 %v1670, 0.0
      %v1685 = vmax.f32 %v1671, 0.0
      %v1686 = vmax.f32 %v1672, 0.0
      %v1687 = vmax.f32 %v1673, 0.0
      %v1688 = vmax.f32 %v1674, 0.0
      %v1689 = vmax.f32 %v1675, 0.0
      %v1690 = vmax.f32 %v1676, 0.0
      %v1691 = vmax.f32 %v1677, 0.0
      %v1692 = vld [vmem:[%s12] sm:$0xff]
      %v1693 = vld [vmem:[%s12 + $0x8] sm:$0xff]
      %v1694 = vld [vmem:[%s12 + $0x10] sm:$0xff]
      %v1695 = vld [vmem:[%s12 + $0x18] sm:$0xff]
      %v1697 = vsel %vm744, %v1682, 0
      %v1700 = vsel %vm744, %v1683, 0
      %v1703 = vsel %vm744, %v1684, 0
      %v1706 = vsel %vm744, %v1685, 0
      %v1709 = vsel %vm744, %v1686, 0
      %v1712 = vsel %vm744, %v1687, 0
      %v1715 = vsel %vm744, %v1688, 0
      %v1718 = vsel %vm744, %v1689, 0
      %v1721 = vsel %vm744, %v1690, 0
      %v1724 = vsel %vm744, %v1691, 0
      %1726 = vmatprep.subr.mxu0 0.0
      %1727 = vmatpush1.msra.mxu0 0.0
      %1728 = vmatprep.subr.mxu0 0.0
      %1729 = vmatpush1.msra.mxu0 0.0
      %1730 = vmatprep.subr.mxu0 0.0
      %1731 = vmatpush1.msra.mxu0 0.0
      %1732 = vmatprep.subr.mxu0 0.0
      %1733 = vmatpush1.msra.mxu0 0.0
      %1734 = vmatprep.subr.mxu0 0.0
      %1735 = vmatpush1.msra.mxu0 0.0
      %1736 = vmatprep.subr.mxu0 0.0
      %1737 = vmatpush1.msra.mxu0 0.0
      %1738 = vmatprep.subr.mxu0 0.0
      %1739 = vmatpush1.msra.mxu0 0.0
      %1740 = vmatprep.subr.mxu0 0.0
      %1741 = vmatpush1.msra.mxu0 0.0
      %1742 = vmatprep.subr.mxu0 0.0
      %1743 = vmatpush1.msra.mxu0 0.0
      %1744 = vmatprep.subr.mxu0 0.0
      %1745 = vmatpush1.msra.mxu0 0.0
      %1746 = vmatprep.subr.mxu0 0.0
      %1747 = vmatpush1.msra.mxu0 0.0
      %1748 = vmatprep.subr.mxu0 0.0
      %1749 = vmatpush1.msra.mxu0 0.0
      %1750 = vmatprep.subr.mxu0 0.0
      %1751 = vmatpush1.msra.mxu0 %v1695
      %1752 = vmatprep.subr.mxu0 0.0
      %1753 = vmatpush1.msra.mxu0 %v1694
      %1754 = vmatprep.subr.mxu0 0.0
      %1755 = vmatpush1.msra.mxu0 %v1693
      %1756 = vmatprep.subr.mxu0 0.0
      %1757 = vmatpush1.msra.mxu0 %v1692
      %1758 = vmatprep.subr.mxu0 0.0
      %1759 = vmatpush2.msra.mxu0 0.0
      %1760 = vmatprep.subr.mxu0 0.0
      %1761 = vmatpush2.msra.mxu0 0.0
      %1762 = vmatprep.subr.mxu0 0.0
      %1763 = vmatpush2.msra.mxu0 0.0
      %1764 = vmatprep.subr.mxu0 0.0
      %1765 = vmatpush2.msra.mxu0 0.0
      %1766 = vmatprep.subr.mxu0 0.0
      %1767 = vmatpush2.msra.mxu0 0.0
      %1768 = vmatprep.subr.mxu0 0.0
      %1769 = vmatpush2.msra.mxu0 0.0
      %1770 = vmatprep.subr.mxu0 0.0
      %1771 = vmatpush2.msra.mxu0 0.0
      %1772 = vmatprep.subr.mxu0 0.0
      %1773 = vmatpush2.msra.mxu0 0.0
      %1774 = vmatprep.subr.mxu0 0.0
      %1775 = vmatpush2.msra.mxu0 0.0
      %1776 = vmatprep.subr.mxu0 0.0
      %1777 = vmatpush2.msra.mxu0 0.0
      %1778 = vmatprep.subr.mxu0 0.0
      %1779 = vmatpush2.msra.mxu0 0.0
      %1780 = vmatprep.subr.mxu0 0.0
      %1781 = vmatpush2.msra.mxu0 0.0
      %1782 = vmatprep.subr.mxu0 0.0
      %1783 = vmatpush2.msra.mxu0 0.0
      %1784 = vmatprep.subr.mxu0 0.0
      %1785 = vmatpush2.msra.mxu0 0.0
      %1786 = vmatprep.subr.mxu0 0.0
      %1787 = vmatpush2.msra.mxu0 0.0
      %1788 = vmatprep.subr.mxu0 0.0
      %1789 = vmatpush2.msra.mxu0 0.0
      %1790 = vmatprep.mubr.f32.mxu0 0.0
      %1791 = vmatmul.mubr.f32.gmra.mxu0 %v1697
      %v1792 = vpop.f32.mrf.mxu0
      %v1793 = vadd.f32 0.0, %v1792
      %v1794 = vpop.f32.mrf.mxu0
      %1795 = vmatprep.mubr.f32.mxu0 0.0
      %1796 = vmatmul.mubr.f32.gmra.mxu0 %v1700
      %v1797 = vpop.f32.mrf.mxu0
      %v1798 = vadd.f32 0.0, %v1797
      %v1799 = vpop.f32.mrf.mxu0
      %1800 = vmatprep.mubr.f32.mxu0 0.0
      %1801 = vmatmul.mubr.f32.gmra.mxu0 %v1703
      %v1802 = vpop.f32.mrf.mxu0
      %v1803 = vadd.f32 0.0, %v1802
      %v1804 = vpop.f32.mrf.mxu0
      %1805 = vmatprep.mubr.f32.mxu0 0.0
      %1806 = vmatmul.mubr.f32.gmra.mxu0 %v1706
      %v1807 = vpop.f32.mrf.mxu0
      %v1808 = vadd.f32 0.0, %v1807
      %v1809 = vpop.f32.mrf.mxu0
      %1810 = vmatprep.mubr.f32.mxu0 0.0
      %1811 = vmatmul.mubr.f32.gmra.mxu0 %v1709
      %v1812 = vpop.f32.mrf.mxu0
      %v1813 = vadd.f32 0.0, %v1812
      %v1814 = vpop.f32.mrf.mxu0
      %1815 = vmatprep.mubr.f32.mxu0 0.0
      %1816 = vmatmul.mubr.f32.gmra.mxu0 %v1712
      %v1817 = vpop.f32.mrf.mxu0
      %v1818 = vadd.f32 0.0, %v1817
      %v1819 = vpop.f32.mrf.mxu0
      %1820 = vmatprep.mubr.f32.mxu0 0.0
      %1821 = vmatmul.mubr.f32.gmra.mxu0 %v1715
      %v1822 = vpop.f32.mrf.mxu0
      %v1823 = vadd.f32 0.0, %v1822
      %v1824 = vpop.f32.mrf.mxu0
      %1825 = vmatprep.mubr.f32.mxu0 0.0
      %1826 = vmatmul.mubr.f32.gmra.mxu0 %v1718
      %v1827 = vpop.f32.mrf.mxu0
      %v1828 = vadd.f32 0.0, %v1827
      %v1829 = vpop.f32.mrf.mxu0
      %1830 = vmatprep.mubr.f32.mxu0 0.0
      %1831 = vmatmul.mubr.f32.gmra.mxu0 %v1721
      %v1832 = vpop.f32.mrf.mxu0
      %v1833 = vadd.f32 0.0, %v1832
      %v1834 = vpop.f32.mrf.mxu0
      %1835 = vmatprep.mubr.f32.mxu0 0.0
      %1836 = vmatmul.mubr.f32.gmra.mxu0 %v1724
      %v1837 = vpop.f32.mrf.mxu0
      %v1838 = vadd.f32 0.0, %v1837
      %v1839 = vpop.f32.mrf.mxu0
      %1840 = vdwg.mxu0
      %1841 = vmatprep.subr.mxu0 0.0
      %1842 = vmatpush1.msra.mxu0 0.0
      %1843 = vmatprep.subr.mxu0 0.0
      %1844 = vmatpush1.msra.mxu0 0.0
      %1845 = vmatprep.subr.mxu0 0.0
      %1846 = vmatpush1.msra.mxu0 0.0
      %1847 = vmatprep.subr.mxu0 0.0
      %1848 = vmatpush1.msra.mxu0 0.0
      %1849 = vmatprep.subr.mxu0 0.0
      %1850 = vmatpush1.msra.mxu0 0.0
      %1851 = vmatprep.subr.mxu0 0.0
      %1852 = vmatpush1.msra.mxu0 0.0
      %1853 = vmatprep.subr.mxu0 0.0
      %1854 = vmatpush1.msra.mxu0 0.0
      %1855 = vmatprep.subr.mxu0 0.0
      %1856 = vmatpush1.msra.mxu0 0.0
      %1857 = vmatprep.subr.mxu0 0.0
      %1858 = vmatpush1.msra.mxu0 0.0
      %1859 = vmatprep.subr.mxu0 0.0
      %1860 = vmatpush1.msra.mxu0 0.0
      %1861 = vmatprep.subr.mxu0 0.0
      %1862 = vmatpush1.msra.mxu0 0.0
      %1863 = vmatprep.subr.mxu0 0.0
      %1864 = vmatpush1.msra.mxu0 0.0
      %1865 = vmatprep.subr.mxu0 0.0
      %1866 = vmatpush1.msra.mxu0 %v1681
      %1867 = vmatprep.subr.mxu0 0.0
      %1868 = vmatpush1.msra.mxu0 %v1680
      %1869 = vmatprep.subr.mxu0 0.0
      %1870 = vmatpush1.msra.mxu0 %v1679
      %1871 = vmatprep.subr.mxu0 0.0
      %1872 = vmatpush1.msra.mxu0 %v1678
      %1873 = vmatprep.subr.mxu0 0.0
      %1874 = vmatpush2.msra.mxu0 0.0
      %1875 = vmatprep.subr.mxu0 0.0
      %1876 = vmatpush2.msra.mxu0 0.0
      %1877 = vmatprep.subr.mxu0 0.0
      %1878 = vmatpush2.msra.mxu0 0.0
      %1879 = vmatprep.subr.mxu0 0.0
      %1880 = vmatpush2.msra.mxu0 0.0
      %1881 = vmatprep.subr.mxu0 0.0
      %1882 = vmatpush2.msra.mxu0 0.0
      %1883 = vmatprep.subr.mxu0 0.0
      %1884 = vmatpush2.msra.mxu0 0.0
      %1885 = vmatprep.subr.mxu0 0.0
      %1886 = vmatpush2.msra.mxu0 0.0
      %1887 = vmatprep.subr.mxu0 0.0
      %1888 = vmatpush2.msra.mxu0 0.0
      %1889 = vmatprep.subr.mxu0 0.0
      %1890 = vmatpush2.msra.mxu0 0.0
      %1891 = vmatprep.subr.mxu0 0.0
      %1892 = vmatpush2.msra.mxu0 0.0
      %1893 = vmatprep.subr.mxu0 0.0
      %1894 = vmatpush2.msra.mxu0 0.0
      %1895 = vmatprep.subr.mxu0 0.0
      %1896 = vmatpush2.msra.mxu0 0.0
      %1897 = vmatprep.subr.mxu0 0.0
      %1898 = vmatpush2.msra.mxu0 0.0
      %1899 = vmatprep.subr.mxu0 0.0
      %1900 = vmatpush2.msra.mxu0 0.0
      %1901 = vmatprep.subr.mxu0 0.0
      %1902 = vmatpush2.msra.mxu0 0.0
      %1903 = vmatprep.subr.mxu0 0.0
      %1904 = vmatpush2.msra.mxu0 0.0
      %1905 = vmatprep.mubr.f32.mxu0 0.0
      %1906 = vmatmul.mubr.f32.gmra.mxu0 %v1382
      %v1907 = vpop.f32.mrf.mxu0
      %v1908 = vadd.f32 %v1793, %v1907
      %v1909 = vpop.f32.mrf.mxu0
      %1910 = vmatprep.mubr.f32.mxu0 0.0
      %1911 = vmatmul.mubr.f32.gmra.mxu0 %v1385
      %v1912 = vpop.f32.mrf.mxu0
      %v1913 = vadd.f32 %v1798, %v1912
      %v1914 = vpop.f32.mrf.mxu0
      %1915 = vmatprep.mubr.f32.mxu0 0.0
      %1916 = vmatmul.mubr.f32.gmra.mxu0 %v1388
      %v1917 = vpop.f32.mrf.mxu0
      %v1918 = vadd.f32 %v1803, %v1917
      %v1919 = vpop.f32.mrf.mxu0
      %1920 = vmatprep.mubr.f32.mxu0 0.0
      %1921 = vmatmul.mubr.f32.gmra.mxu0 %v1391
      %v1922 = vpop.f32.mrf.mxu0
      %v1923 = vadd.f32 %v1808, %v1922
      %v1924 = vpop.f32.mrf.mxu0
      %1925 = vmatprep.mubr.f32.mxu0 0.0
      %1926 = vmatmul.mubr.f32.gmra.mxu0 %v1394
      %v1927 = vpop.f32.mrf.mxu0
      %v1928 = vadd.f32 %v1813, %v1927
      %v1929 = vpop.f32.mrf.mxu0
      %1930 = vmatprep.mubr.f32.mxu0 0.0
      %1931 = vmatmul.mubr.f32.gmra.mxu0 %v1397
      %v1932 = vpop.f32.mrf.mxu0
      %v1933 = vadd.f32 %v1818, %v1932
      %v1934 = vpop.f32.mrf.mxu0
      %1935 = vmatprep.mubr.f32.mxu0 0.0
      %1936 = vmatmul.mubr.f32.gmra.mxu0 %v1400
      %v1937 = vpop.f32.mrf.mxu0
      %v1938 = vadd.f32 %v1823, %v1937
      %v1939 = vpop.f32.mrf.mxu0
      %1940 = vmatprep.mubr.f32.mxu0 0.0
      %1941 = vmatmul.mubr.f32.gmra.mxu0 %v1403
      %v1942 = vpop.f32.mrf.mxu0
      %v1943 = vadd.f32 %v1828, %v1942
      %v1944 = vpop.f32.mrf.mxu0
      %1945 = vmatprep.mubr.f32.mxu0 0.0
      %1946 = vmatmul.mubr.f32.gmra.mxu0 %v1406
      %v1947 = vpop.f32.mrf.mxu0
      %v1948 = vadd.f32 %v1833, %v1947
      %v1949 = vpop.f32.mrf.mxu0
      %1950 = vmatprep.mubr.f32.mxu0 0.0
      %1951 = vmatmul.mubr.f32.gmra.mxu0 %v1409
      %v1952 = vpop.f32.mrf.mxu0
      %v1953 = vadd.f32 %v1838, %v1952
      %v1954 = vpop.f32.mrf.mxu0
      %1955 = vdwg.mxu0
      %v1956 = vld [vmem:[#allocation2] sm:$0x1]
      %v1958 = vlaneseq
      %v1959 = vshrl.u32 %v1958, 7
      %v1960 = vsub.s32 0, %v1959
      %v1961 = vrot.slane %v1956, %v1960
      %v1963 = vadd.f32 %v1908, %v1961
      %v1964 = vadd.f32 %v1913, %v1961
      %v1965 = vadd.f32 %v1918, %v1961
      %v1966 = vadd.f32 %v1923, %v1961
      %v1967 = vadd.f32 %v1928, %v1961
      %v1968 = vadd.f32 %v1933, %v1961
      %v1969 = vadd.f32 %v1938, %v1961
      %v1970 = vadd.f32 %v1943, %v1961
      %v1971 = vadd.f32 %v1948, %v1961
      %v1972 = vadd.f32 %v1953, %v1961
      %vm1973 = vcmask 7168
      %1974 = vst.msk [vmem:[%s493] sm:$0xff] %vm1973, %v1963
      %1975 = vst.msk [vmem:[%s493 + $0x8] sm:$0xff] %vm1973, %v1964
      %1976 = vst.msk [vmem:[%s493 + $0x10] sm:$0xff] %vm1973, %v1965
      %1977 = vst.msk [vmem:[%s493 + $0x18] sm:$0xff] %vm1973, %v1966
      %1978 = vst.msk [vmem:[%s493 + $0x20] sm:$0xff] %vm1973, %v1967
      %1979 = vst.msk [vmem:[%s493 + $0x28] sm:$0xff] %vm1973, %v1968
      %1980 = vst.msk [vmem:[%s493 + $0x30] sm:$0xff] %vm1973, %v1969
      %1981 = vst.msk [vmem:[%s493 + $0x38] sm:$0xff] %vm1973, %v1970
      %1982 = vst.msk [vmem:[%s493 + $0x40] sm:$0xff] %vm1973, %v1971
      %1983 = vst.msk [vmem:[%s493 + $0x48] sm:$0xff] %vm1973, %v1972
      %s1984 = smul.u32 10, %s27
      %p1985 = scmp.lt.s32.totalorder %s1984, 19
      %s1986 = scalar_select %p1985, %s1984, 19
      %s1987 = smul.addr %s1986, 8
      %s1988 = scalar_lea.vmem %s14, %s1987
      // Predicated region
      $region77: #{tpu_custom_call.1} parent=75 // pred_check
        %p1989 = pneg %p349
      $region78: #{tpu_custom_call.1} parent=75 // pred_check_branch
        %1991 = sbr.rel (%p1989) target = $region80
      $region79: #{tpu_custom_call.1} parent=75 // pred_region
        %s1992 = smul.u32 10, %s27
      $region80: #{tpu_custom_call.1} parent=75 // pred_fallthru
        _
    $region76: #{tpu_custom_call.1} parent=5 // pred_fallthru
      _
    %p1993 = scmp.le.s32.totalorder 2, %s22
    // Predicated region
    $region81: #{tpu_custom_call.1} parent=5 // pred_check
      %p1994 = pneg %p1993
    $region82: #{tpu_custom_call.1} parent=5 // pred_check_branch
      %1996 = sbr.rel (%p1994) target = $region84
    $region83: #{tpu_custom_call.1} parent=5 // pred_region
      %s1997 = ssub.s32 %s22, 2
      // Predicated region
      $region85: #{tpu_custom_call.1} parent=83 // pred_check
        %p1998 = pneg %p355
      $region86: #{tpu_custom_call.1} parent=83 // pred_check_branch
        %2000 = sbr.rel (%p1998) target = $region88
      $region87: #{tpu_custom_call.1} parent=83 // pred_region
        %s2001 = smul.u32 10, %s28
        %p2002 = scmp.lt.s32.totalorder %s2001, 19
        %s2003 = scalar_select %p2002, %s2001, 19
        %s2004 = smul.addr %s2003, 8
        %s2005 = scalar_lea.vmem %s14, %s2004
      $region88: #{tpu_custom_call.1} parent=83 // pred_fallthru
        _
    $region84: #{tpu_custom_call.1} parent=5 // pred_fallthru
      _
  $region6: #{tpu_custom_call.1} parent=0 // loop_footer
    %s26 = sadd.s32 1, %s22
  $region7: #{tpu_custom_call.1} parent=0 // loop_footer_branch
    %21 = sbr.rel target = $region3
  $region8: #{tpu_custom_call.1} parent=0 // loop_exit
    _

</llo_original>
